<compile_context>
chip_gen: v6e
topology: v6e:2x2x1
jax: 0.10.0
libtpu: 0.0.40
codegen_flags: <defaults>
</compile_context>

<pallas_src>
import jax
import jax.numpy as jnp
from jax.experimental import pallas as pl
from jax.experimental.pallas import tpu as pltpu


# ----------------------------------------------------------------------------
# In-kernel helpers (all operate on (TN, C, L): C on sublanes, L on lanes).
# ----------------------------------------------------------------------------
def _shift_right(x):
    """y[..., l] = x[..., l-1]; zero at l = 0 (conv zero padding)."""
    l = x.shape[-1]
    zero = jnp.zeros(x.shape[:-1] + (1,), x.dtype)
    return jnp.concatenate([zero, x[..., : l - 1]], axis=-1)


def _shift_left(x):
    """y[..., l] = x[..., l+1]; zero at l = L-1 (conv zero padding)."""
    zero = jnp.zeros(x.shape[:-1] + (1,), x.dtype)
    return jnp.concatenate([x[..., 1:], zero], axis=-1)


def _conv3(h, w_ref, b_ref, act):
    """'same' conv (k=3, s=1, p=1) as ONE batched MXU matmul. Dropout = id.

    h     : (TN, Cin, L) float32
    w_ref : (Cout, 3*Cin) bfloat16, tap-major ([k=0 | k=1 | k=2] Cin blocks)
    b_ref : (Cout, 1) float32
    """
    tn, cin, _ = h.shape
    cout = w_ref.shape[0]
    # Taps via lane shifts (zero boundary) + sublane concat -> (TN, 3*Cin, L).
    xcat = jnp.concatenate([_shift_right(h), h, _shift_left(h)], axis=1)
    w_b = jnp.broadcast_to(w_ref[...][None], (tn, cout, 3 * cin))
    y = jnp.einsum(
        "nok,nkl->nol",
        w_b,
        xcat.astype(jnp.bfloat16),
        preferred_element_type=jnp.float32,
    )                                       # (TN, Cout, L) f32 accumulate
    y = y + b_ref[...]                      # (Cout, 1) broadcasts over (TN, Cout, L)
    if act == "relu":
        return jnp.maximum(y, 0.0)
    return 1.0 / (1.0 + jnp.exp(-y))        # exact sigmoid (stays in [0, 1])


def _maxpool2(h, sel_ref):
    """MaxPool1d(2): pairwise max + even-lane compaction as a 0/1 matmul."""
    tn, c, l = h.shape
    m = jnp.maximum(h, _shift_left(h))      # m[..., l] = max(x[l], x[l+1])
    p = jnp.dot(m.reshape(tn * c, l), sel_ref[...],
                preferred_element_type=jnp.float32)
    return p.reshape(tn, c, l // 2)


def _upsample2(h, up_ref):
    """nn.Upsample(scale_factor=2), nearest, as a 0/1 matmul along L."""
    tn, c, m = h.shape
    u = jnp.dot(h.reshape(tn * c, m), up_ref[...],
                preferred_element_type=jnp.float32)
    return u.reshape(tn, c, 2 * m)


# ----------------------------------------------------------------------------
# Fused forward kernel.
# ----------------------------------------------------------------------------
def _cnn_ae_kernel(x_ref,
                   we1, be1, we2, be2, we3, be3,
                   wd1, bd1, wd2, bd2, wd3, bd3,
                   s1, s2, u1, u2,
                   o_ref):
    h = x_ref[...].astype(jnp.float32)                       # (TN, C, L)
    # ---------------- encoder ----------------
    h = _maxpool2(_conv3(h, we1, be1, "relu"), s1)           # (TN, 16, L/2)
    h = _maxpool2(_conv3(h, we2, be2, "relu"), s2)           # (TN, 32, L/4)
    h = _conv3(h, we3, be3, "relu")                          # (TN, 64, L/4)
    # ---------------- decoder ----------------
    h = _conv3(_upsample2(h, u1), wd1, bd1, "relu")          # (TN, 32, L/2)
    h = _conv3(_upsample2(h, u2), wd2, bd2, "relu")          # (TN, 16, L)
    h = _conv3(h, wd3, bd3, "sigmoid")                       # (TN, C, L)
    o_ref[...] = h.astype(o_ref.dtype)


# ----------------------------------------------------------------------------
# Wrapper: batch-tiled pallas_call, constants resident in VMEM.
# ----------------------------------------------------------------------------
def _pool_select(l, dtype=jnp.float32):
    """(L, L//2) 0/1 matrix selecting even lanes: out[i] = in[2i]."""
    rows = jnp.arange(l)[:, None]
    cols = jnp.arange(l // 2)[None, :]
    return (rows == 2 * cols).astype(dtype)


def _upsample_select(m, dtype=jnp.float32):
    """(M, 2M) 0/1 matrix: out[2i] = out[2i+1] = in[i]."""
    rows = jnp.arange(m)[:, None]
    cols = jnp.arange(2 * m)[None, :]
    return (rows == cols // 2).astype(dtype)


@jax.jit
def cnn_autoencoder_forward(x_ncl, params):
    n, c, l = x_ncl.shape
    assert l % 4 == 0, "L must be divisible by 4 (two MaxPool1d(2))"

    tn = min(n, 8)                          # batch tile per grid step
    n_pad = -(-n // tn) * tn
    x = x_ncl.astype(jnp.float32)
    if n_pad != n:
        x = jnp.concatenate(
            [x, jnp.zeros((n_pad - n, c, l), jnp.float32)], axis=0)

    # Constant 0/1 pool / upsample matrices (VMEM-resident across the grid).
    s1 = _pool_select(l)
    s2 = _pool_select(l // 2)
    u1 = _upsample_select(l // 4)
    u2 = _upsample_select(l // 2)

    consts = (
        params["e1_w"].astype(jnp.bfloat16), params["e1_b"],
        params["e2_w"].astype(jnp.bfloat16), params["e2_b"],
        params["e3_w"].astype(jnp.bfloat16), params["e3_b"],
        params["d1_w"].astype(jnp.bfloat16), params["d1_b"],
        params["d2_w"].astype(jnp.bfloat16), params["d2_b"],
        params["d3_w"].astype(jnp.bfloat16), params["d3_b"],
        s1, s2, u1, u2,
    )

    def const_spec(a):
        nd = a.ndim
        return pl.BlockSpec(a.shape, lambda i, _nd=nd: (0,) * _nd)

    out = pl.pallas_call(
        _cnn_ae_kernel,
        out_shape=jax.ShapeDtypeStruct((n_pad, c, l), jnp.float32),
        grid=(n_pad // tn,),
        in_specs=[pl.BlockSpec((tn, c, l), lambda i: (i, 0, 0))]
                 + [const_spec(a) for a in consts],
        out_specs=pl.BlockSpec((tn, c, l), lambda i: (i, 0, 0)),
        compiler_params=pltpu.CompilerParams(
            dimension_semantics=("parallel",),      # mandatory for v7x 2 TCs
            vmem_limit_bytes=48 * 1024 * 1024,
        ),
    )(x, *consts)
    return out[:n]


# ----------------------------------------------------------------------------
# Parameter construction (deterministic, synthetic — PyTorch-shaped weights
# are generated, then converted to the kernel's (Cout, 3*Cin) tap-major layout).
# ----------------------------------------------------------------------------
def _uniform(key, shape, fan):
    bound = 1.0 / jnp.sqrt(jnp.asarray(fan, jnp.float32))
    return jax.random.uniform(key, shape, jnp.float32, -bound, bound)


def _init_conv(key, cout, cin, k=3):
    """nn.Conv1d(cin, cout, 3, padding=1) -> (Cout, 3*Cin) tap-major matrix."""
    kw, kb = jax.random.split(key)
    w = _uniform(kw, (cout, cin, k), cin * k)               # PyTorch Conv1d weight
    b = _uniform(kb, (cout,), cin * k)
    w_mat = jnp.transpose(w, (0, 2, 1)).reshape(cout, k * cin)
    return w_mat, b.reshape(cout, 1)


def _init_convT(key, cin, cout, k=3):
    """nn.ConvTranspose1d(cin, cout, 3, stride=1, padding=1).

    stride=1, pad=1 transposed conv == same conv with flipped, transposed kernel.
    """
    kw, kb = jax.random.split(key)
    w_t = _uniform(kw, (cin, cout, k), cout * k)            # PyTorch ConvT weight
    b = _uniform(kb, (cout,), cout * k)
    w_eff = jnp.transpose(jnp.flip(w_t, axis=2), (1, 0, 2))     # (Cout, Cin, K)
    w_mat = jnp.transpose(w_eff, (0, 2, 1)).reshape(cout, k * cin)
    return w_mat, b.reshape(cout, 1)


def make_params(no_channels=1, seed=0):
    keys = jax.random.split(jax.random.PRNGKey(seed), 6)
    p = {}
    p["e1_w"], p["e1_b"] = _init_conv(keys[0], 16, no_channels)
    p["e2_w"], p["e2_b"] = _init_conv(keys[1], 32, 16)
    p["e3_w"], p["e3_b"] = _init_conv(keys[2], 64, 32)
    p["d1_w"], p["d1_b"] = _init_convT(keys[3], 64, 32)
    p["d2_w"], p["d2_b"] = _init_convT(keys[4], 32, 16)
    p["d3_w"], p["d3_b"] = _init_convT(keys[5], 16, no_channels)
    return p


if __name__ == "__main__":
    no_channels = 1
    N, L = 2, 16                            # L divisible by 4 (two MaxPool1d(2))

    key = jax.random.PRNGKey(0)
    x = jax.random.uniform(key, (N, no_channels, L), jnp.float32)
    params = make_params(no_channels=no_channels, seed=0)

    y = cnn_autoencoder_forward(x, params)
    y = jax.block_until_ready(y)

    assert y.shape == (N, no_channels, L), y.shape
    assert bool(jnp.all(jnp.isfinite(y))), "non-finite output"
    assert bool(jnp.all((y >= 0.0) & (y <= 1.0))), "sigmoid range violated"
    print("KERNEL_OK")
</pallas_src>

<mosaic_0001>
module attributes {stable_mosaic.version = 11 : i64} {
  func.func @_cnn_ae_kernel(%arg0: i32, %arg1: memref<2x1x16xf32, #tpu.memory_space<vmem>>, %arg2: memref<16x3xbf16, #tpu.memory_space<vmem>>, %arg3: memref<16x1xf32, #tpu.memory_space<vmem>>, %arg4: memref<32x48xbf16, #tpu.memory_space<vmem>>, %arg5: memref<32x1xf32, #tpu.memory_space<vmem>>, %arg6: memref<64x96xbf16, #tpu.memory_space<vmem>>, %arg7: memref<64x1xf32, #tpu.memory_space<vmem>>, %arg8: memref<32x192xbf16, #tpu.memory_space<vmem>>, %arg9: memref<32x1xf32, #tpu.memory_space<vmem>>, %arg10: memref<16x96xbf16, #tpu.memory_space<vmem>>, %arg11: memref<16x1xf32, #tpu.memory_space<vmem>>, %arg12: memref<1x48xbf16, #tpu.memory_space<vmem>>, %arg13: memref<1x1xf32, #tpu.memory_space<vmem>>, %arg14: memref<16x8xf32, #tpu.memory_space<vmem>>, %arg15: memref<8x4xf32, #tpu.memory_space<vmem>>, %arg16: memref<4x8xf32, #tpu.memory_space<vmem>>, %arg17: memref<8x16xf32, #tpu.memory_space<vmem>>, %arg18: memref<2x1x16xf32, #tpu.memory_space<vmem>>) attributes {dimension_semantics = [#tpu.dimension_semantics<parallel>], iteration_bounds = array<i64: 1>, scalar_prefetch = 0 : i64, scratch_operands = 0 : i64, tpu.core_type = #tpu.core_type<tc>, window_params = [{transform_indices = @transform_0, window_bounds = array<i64: 2, 1, 16>}, {pipeline_mode = #tpu.pipeline_mode<synchronous>, transform_indices = @transform_1, window_bounds = array<i64: 16, 3>}, {pipeline_mode = #tpu.pipeline_mode<synchronous>, transform_indices = @transform_2, window_bounds = array<i64: 16, 1>}, {pipeline_mode = #tpu.pipeline_mode<synchronous>, transform_indices = @transform_3, window_bounds = array<i64: 32, 48>}, {pipeline_mode = #tpu.pipeline_mode<synchronous>, transform_indices = @transform_4, window_bounds = array<i64: 32, 1>}, {pipeline_mode = #tpu.pipeline_mode<synchronous>, transform_indices = @transform_5, window_bounds = array<i64: 64, 96>}, {pipeline_mode = #tpu.pipeline_mode<synchronous>, transform_indices = @transform_6, window_bounds = array<i64: 64, 1>}, {pipeline_mode = #tpu.pipeline_mode<synchronous>, transform_indices = @transform_7, window_bounds = array<i64: 32, 192>}, {pipeline_mode = #tpu.pipeline_mode<synchronous>, transform_indices = @transform_8, window_bounds = array<i64: 32, 1>}, {pipeline_mode = #tpu.pipeline_mode<synchronous>, transform_indices = @transform_9, window_bounds = array<i64: 16, 96>}, {pipeline_mode = #tpu.pipeline_mode<synchronous>, transform_indices = @transform_10, window_bounds = array<i64: 16, 1>}, {pipeline_mode = #tpu.pipeline_mode<synchronous>, transform_indices = @transform_11, window_bounds = array<i64: 1, 48>}, {pipeline_mode = #tpu.pipeline_mode<synchronous>, transform_indices = @transform_12, window_bounds = array<i64: 1, 1>}, {pipeline_mode = #tpu.pipeline_mode<synchronous>, transform_indices = @transform_13, window_bounds = array<i64: 16, 8>}, {pipeline_mode = #tpu.pipeline_mode<synchronous>, transform_indices = @transform_14, window_bounds = array<i64: 8, 4>}, {pipeline_mode = #tpu.pipeline_mode<synchronous>, transform_indices = @transform_15, window_bounds = array<i64: 4, 8>}, {pipeline_mode = #tpu.pipeline_mode<synchronous>, transform_indices = @transform_16, window_bounds = array<i64: 8, 16>}, {transform_indices = @transform_17, window_bounds = array<i64: 2, 1, 16>}]} {
    %c0 = arith.constant 0 : index
    %c0_0 = arith.constant 0 : index
    %c0_1 = arith.constant 0 : index
    %0 = vector.load %arg1[%c0, %c0_0, %c0_1] : memref<2x1x16xf32, #tpu.memory_space<vmem>>, vector<2x1x16xf32>
    %cst = arith.constant 0.000000e+00 : f32
    %1 = vector.broadcast %cst : f32 to vector<2x1x1xf32>
    %2 = vector.extract_strided_slice %0 {offsets = [0, 0, 0], sizes = [2, 1, 15], strides = [1, 1, 1]} : vector<2x1x16xf32> to vector<2x1x15xf32>
    %3 = tpu.concatenate %1, %2 in 2 : vector<2x1x1xf32>, vector<2x1x15xf32> -> vector<2x1x16xf32>
    %cst_2 = arith.constant 0.000000e+00 : f32
    %4 = vector.broadcast %cst_2 : f32 to vector<2x1x1xf32>
    %5 = vector.extract_strided_slice %0 {offsets = [0, 0, 1], sizes = [2, 1, 15], strides = [1, 1, 1]} : vector<2x1x16xf32> to vector<2x1x15xf32>
    %6 = tpu.concatenate %5, %4 in 2 : vector<2x1x15xf32>, vector<2x1x1xf32> -> vector<2x1x16xf32>
    %7 = tpu.concatenate %3, %0, %6 in 1 : vector<2x1x16xf32>, vector<2x1x16xf32>, vector<2x1x16xf32> -> vector<2x3x16xf32>
    %c0_3 = arith.constant 0 : index
    %c0_4 = arith.constant 0 : index
    %8 = vector.load %arg2[%c0_3, %c0_4] : memref<16x3xbf16, #tpu.memory_space<vmem>>, vector<16x3xbf16>
    %9 = vector.shape_cast %8 : vector<16x3xbf16> to vector<1x16x3xbf16>
    %10 = vector.shape_cast %9 : vector<1x16x3xbf16> to vector<1x16x3xbf16>
    %11 = vector.broadcast %10 : vector<1x16x3xbf16> to vector<2x16x3xbf16>
    %12 = arith.truncf %7 : vector<2x3x16xf32> to vector<2x3x16xbf16>
    "tpu.trace_start"() <{level = 10 : i32, message = "nok,nkl->nol"}> : () -> ()
    %cst_5 = arith.constant dense<0.000000e+00> : vector<2x16x16xf32>
    %13 = tpu.matmul %11, %12, %cst_5 {dimension_numbers = #tpu.dot_dimension_numbers<[2], [1], [1], [2], [0, 0, 0, 1, 1, 2], [0], [0]>} : vector<2x16x3xbf16>, vector<2x3x16xbf16>, vector<2x16x16xf32> -> vector<2x16x16xf32>
    "tpu.trace_stop"() : () -> ()
    %c0_6 = arith.constant 0 : index
    %c0_7 = arith.constant 0 : index
    %14 = vector.load %arg3[%c0_6, %c0_7] : memref<16x1xf32, #tpu.memory_space<vmem>>, vector<16x1xf32>
    %15 = vector.shape_cast %14 : vector<16x1xf32> to vector<1x16x1xf32>
    %16 = vector.broadcast %15 : vector<1x16x1xf32> to vector<2x16x16xf32>
    %17 = arith.addf %13, %16 : vector<2x16x16xf32>
    %cst_8 = arith.constant 0.000000e+00 : f32
    %18 = vector.broadcast %cst_8 : f32 to vector<2x16x16xf32>
    %19 = arith.maximumf %17, %18 : vector<2x16x16xf32>
    %cst_9 = arith.constant 0.000000e+00 : f32
    %20 = vector.broadcast %cst_9 : f32 to vector<2x16x1xf32>
    %21 = vector.extract_strided_slice %19 {offsets = [0, 0, 1], sizes = [2, 16, 15], strides = [1, 1, 1]} : vector<2x16x16xf32> to vector<2x16x15xf32>
    %22 = tpu.concatenate %21, %20 in 2 : vector<2x16x15xf32>, vector<2x16x1xf32> -> vector<2x16x16xf32>
    %23 = arith.maximumf %19, %22 : vector<2x16x16xf32>
    %24 = vector.shape_cast %23 : vector<2x16x16xf32> to vector<32x16xf32>
    %c0_10 = arith.constant 0 : index
    %c0_11 = arith.constant 0 : index
    %25 = vector.load %arg14[%c0_10, %c0_11] : memref<16x8xf32, #tpu.memory_space<vmem>>, vector<16x8xf32>
    %cst_12 = arith.constant dense<0.000000e+00> : vector<32x8xf32>
    %26 = tpu.matmul %24, %25, %cst_12 {dimension_numbers = #tpu.dot_dimension_numbers<[1], [0], [0], [1], [0, 0, 1, 1], [], []>} : vector<32x16xf32>, vector<16x8xf32>, vector<32x8xf32> -> vector<32x8xf32>
    %27 = vector.shape_cast %26 : vector<32x8xf32> to vector<2x16x8xf32>
    %cst_13 = arith.constant 0.000000e+00 : f32
    %28 = vector.broadcast %cst_13 : f32 to vector<2x16x1xf32>
    %29 = vector.extract_strided_slice %27 {offsets = [0, 0, 0], sizes = [2, 16, 7], strides = [1, 1, 1]} : vector<2x16x8xf32> to vector<2x16x7xf32>
    %30 = tpu.concatenate %28, %29 in 2 : vector<2x16x1xf32>, vector<2x16x7xf32> -> vector<2x16x8xf32>
    %cst_14 = arith.constant 0.000000e+00 : f32
    %31 = vector.broadcast %cst_14 : f32 to vector<2x16x1xf32>
    %32 = vector.extract_strided_slice %27 {offsets = [0, 0, 1], sizes = [2, 16, 7], strides = [1, 1, 1]} : vector<2x16x8xf32> to vector<2x16x7xf32>
    %33 = tpu.concatenate %32, %31 in 2 : vector<2x16x7xf32>, vector<2x16x1xf32> -> vector<2x16x8xf32>
    %34 = tpu.concatenate %30, %27, %33 in 1 : vector<2x16x8xf32>, vector<2x16x8xf32>, vector<2x16x8xf32> -> vector<2x48x8xf32>
    %c0_15 = arith.constant 0 : index
    %c0_16 = arith.constant 0 : index
    %35 = vector.load %arg4[%c0_15, %c0_16] : memref<32x48xbf16, #tpu.memory_space<vmem>>, vector<32x48xbf16>
    %36 = vector.shape_cast %35 : vector<32x48xbf16> to vector<1x32x48xbf16>
    %37 = vector.shape_cast %36 : vector<1x32x48xbf16> to vector<1x32x48xbf16>
    %38 = vector.broadcast %37 : vector<1x32x48xbf16> to vector<2x32x48xbf16>
    %39 = arith.truncf %34 : vector<2x48x8xf32> to vector<2x48x8xbf16>
    "tpu.trace_start"() <{level = 10 : i32, message = "nok,nkl->nol"}> : () -> ()
    %cst_17 = arith.constant dense<0.000000e+00> : vector<2x32x8xf32>
    %40 = tpu.matmul %38, %39, %cst_17 {dimension_numbers = #tpu.dot_dimension_numbers<[2], [1], [1], [2], [0, 0, 0, 1, 1, 2], [0], [0]>} : vector<2x32x48xbf16>, vector<2x48x8xbf16>, vector<2x32x8xf32> -> vector<2x32x8xf32>
    "tpu.trace_stop"() : () -> ()
    %c0_18 = arith.constant 0 : index
    %c0_19 = arith.constant 0 : index
    %41 = vector.load %arg5[%c0_18, %c0_19] : memref<32x1xf32, #tpu.memory_space<vmem>>, vector<32x1xf32>
    %42 = vector.shape_cast %41 : vector<32x1xf32> to vector<1x32x1xf32>
    %43 = vector.broadcast %42 : vector<1x32x1xf32> to vector<2x32x8xf32>
    %44 = arith.addf %40, %43 : vector<2x32x8xf32>
    %cst_20 = arith.constant 0.000000e+00 : f32
    %45 = vector.broadcast %cst_20 : f32 to vector<2x32x8xf32>
    %46 = arith.maximumf %44, %45 : vector<2x32x8xf32>
    %cst_21 = arith.constant 0.000000e+00 : f32
    %47 = vector.broadcast %cst_21 : f32 to vector<2x32x1xf32>
    %48 = vector.extract_strided_slice %46 {offsets = [0, 0, 1], sizes = [2, 32, 7], strides = [1, 1, 1]} : vector<2x32x8xf32> to vector<2x32x7xf32>
    %49 = tpu.concatenate %48, %47 in 2 : vector<2x32x7xf32>, vector<2x32x1xf32> -> vector<2x32x8xf32>
    %50 = arith.maximumf %46, %49 : vector<2x32x8xf32>
    %51 = vector.shape_cast %50 : vector<2x32x8xf32> to vector<64x8xf32>
    %c0_22 = arith.constant 0 : index
    %c0_23 = arith.constant 0 : index
    %52 = vector.load %arg15[%c0_22, %c0_23] : memref<8x4xf32, #tpu.memory_space<vmem>>, vector<8x4xf32>
    %cst_24 = arith.constant dense<0.000000e+00> : vector<64x4xf32>
    %53 = tpu.matmul %51, %52, %cst_24 {dimension_numbers = #tpu.dot_dimension_numbers<[1], [0], [0], [1], [0, 0, 1, 1], [], []>} : vector<64x8xf32>, vector<8x4xf32>, vector<64x4xf32> -> vector<64x4xf32>
    %54 = vector.shape_cast %53 : vector<64x4xf32> to vector<2x32x4xf32>
    %cst_25 = arith.constant 0.000000e+00 : f32
    %55 = vector.broadcast %cst_25 : f32 to vector<2x32x1xf32>
    %56 = vector.extract_strided_slice %54 {offsets = [0, 0, 0], sizes = [2, 32, 3], strides = [1, 1, 1]} : vector<2x32x4xf32> to vector<2x32x3xf32>
    %57 = tpu.concatenate %55, %56 in 2 : vector<2x32x1xf32>, vector<2x32x3xf32> -> vector<2x32x4xf32>
    %cst_26 = arith.constant 0.000000e+00 : f32
    %58 = vector.broadcast %cst_26 : f32 to vector<2x32x1xf32>
    %59 = vector.extract_strided_slice %54 {offsets = [0, 0, 1], sizes = [2, 32, 3], strides = [1, 1, 1]} : vector<2x32x4xf32> to vector<2x32x3xf32>
    %60 = tpu.concatenate %59, %58 in 2 : vector<2x32x3xf32>, vector<2x32x1xf32> -> vector<2x32x4xf32>
    %61 = tpu.concatenate %57, %54, %60 in 1 : vector<2x32x4xf32>, vector<2x32x4xf32>, vector<2x32x4xf32> -> vector<2x96x4xf32>
    %c0_27 = arith.constant 0 : index
    %c0_28 = arith.constant 0 : index
    %62 = vector.load %arg6[%c0_27, %c0_28] : memref<64x96xbf16, #tpu.memory_space<vmem>>, vector<64x96xbf16>
    %63 = vector.shape_cast %62 : vector<64x96xbf16> to vector<1x64x96xbf16>
    %64 = vector.shape_cast %63 : vector<1x64x96xbf16> to vector<1x64x96xbf16>
    %65 = vector.broadcast %64 : vector<1x64x96xbf16> to vector<2x64x96xbf16>
    %66 = arith.truncf %61 : vector<2x96x4xf32> to vector<2x96x4xbf16>
    "tpu.trace_start"() <{level = 10 : i32, message = "nok,nkl->nol"}> : () -> ()
    %cst_29 = arith.constant dense<0.000000e+00> : vector<2x64x4xf32>
    %67 = tpu.matmul %65, %66, %cst_29 {dimension_numbers = #tpu.dot_dimension_numbers<[2], [1], [1], [2], [0, 0, 0, 1, 1, 2], [0], [0]>} : vector<2x64x96xbf16>, vector<2x96x4xbf16>, vector<2x64x4xf32> -> vector<2x64x4xf32>
    "tpu.trace_stop"() : () -> ()
    %c0_30 = arith.constant 0 : index
    %c0_31 = arith.constant 0 : index
    %68 = vector.load %arg7[%c0_30, %c0_31] : memref<64x1xf32, #tpu.memory_space<vmem>>, vector<64x1xf32>
    %69 = vector.shape_cast %68 : vector<64x1xf32> to vector<1x64x1xf32>
    %70 = vector.broadcast %69 : vector<1x64x1xf32> to vector<2x64x4xf32>
    %71 = arith.addf %67, %70 : vector<2x64x4xf32>
    %cst_32 = arith.constant 0.000000e+00 : f32
    %72 = vector.broadcast %cst_32 : f32 to vector<2x64x4xf32>
    %73 = arith.maximumf %71, %72 : vector<2x64x4xf32>
    %74 = vector.shape_cast %73 : vector<2x64x4xf32> to vector<128x4xf32>
    %c0_33 = arith.constant 0 : index
    %c0_34 = arith.constant 0 : index
    %75 = vector.load %arg16[%c0_33, %c0_34] : memref<4x8xf32, #tpu.memory_space<vmem>>, vector<4x8xf32>
    %cst_35 = arith.constant dense<0.000000e+00> : vector<128x8xf32>
    %76 = tpu.matmul %74, %75, %cst_35 {dimension_numbers = #tpu.dot_dimension_numbers<[1], [0], [0], [1], [0, 0, 1, 1], [], []>} : vector<128x4xf32>, vector<4x8xf32>, vector<128x8xf32> -> vector<128x8xf32>
    %77 = vector.shape_cast %76 : vector<128x8xf32> to vector<2x64x8xf32>
    %cst_36 = arith.constant 0.000000e+00 : f32
    %78 = vector.broadcast %cst_36 : f32 to vector<2x64x1xf32>
    %79 = vector.extract_strided_slice %77 {offsets = [0, 0, 0], sizes = [2, 64, 7], strides = [1, 1, 1]} : vector<2x64x8xf32> to vector<2x64x7xf32>
    %80 = tpu.concatenate %78, %79 in 2 : vector<2x64x1xf32>, vector<2x64x7xf32> -> vector<2x64x8xf32>
    %cst_37 = arith.constant 0.000000e+00 : f32
    %81 = vector.broadcast %cst_37 : f32 to vector<2x64x1xf32>
    %82 = vector.extract_strided_slice %77 {offsets = [0, 0, 1], sizes = [2, 64, 7], strides = [1, 1, 1]} : vector<2x64x8xf32> to vector<2x64x7xf32>
    %83 = tpu.concatenate %82, %81 in 2 : vector<2x64x7xf32>, vector<2x64x1xf32> -> vector<2x64x8xf32>
    %84 = tpu.concatenate %80, %77, %83 in 1 : vector<2x64x8xf32>, vector<2x64x8xf32>, vector<2x64x8xf32> -> vector<2x192x8xf32>
    %c0_38 = arith.constant 0 : index
    %c0_39 = arith.constant 0 : index
    %85 = vector.load %arg8[%c0_38, %c0_39] : memref<32x192xbf16, #tpu.memory_space<vmem>>, vector<32x192xbf16>
    %86 = vector.shape_cast %85 : vector<32x192xbf16> to vector<1x32x192xbf16>
    %87 = vector.shape_cast %86 : vector<1x32x192xbf16> to vector<1x32x192xbf16>
    %88 = vector.broadcast %87 : vector<1x32x192xbf16> to vector<2x32x192xbf16>
    %89 = arith.truncf %84 : vector<2x192x8xf32> to vector<2x192x8xbf16>
    "tpu.trace_start"() <{level = 10 : i32, message = "nok,nkl->nol"}> : () -> ()
    %cst_40 = arith.constant dense<0.000000e+00> : vector<2x32x8xf32>
    %90 = tpu.matmul %88, %89, %cst_40 {dimension_numbers = #tpu.dot_dimension_numbers<[2], [1], [1], [2], [0, 0, 0, 1, 1, 2], [0], [0]>} : vector<2x32x192xbf16>, vector<2x192x8xbf16>, vector<2x32x8xf32> -> vector<2x32x8xf32>
    "tpu.trace_stop"() : () -> ()
    %c0_41 = arith.constant 0 : index
    %c0_42 = arith.constant 0 : index
    %91 = vector.load %arg9[%c0_41, %c0_42] : memref<32x1xf32, #tpu.memory_space<vmem>>, vector<32x1xf32>
    %92 = vector.shape_cast %91 : vector<32x1xf32> to vector<1x32x1xf32>
    %93 = vector.broadcast %92 : vector<1x32x1xf32> to vector<2x32x8xf32>
    %94 = arith.addf %90, %93 : vector<2x32x8xf32>
    %cst_43 = arith.constant 0.000000e+00 : f32
    %95 = vector.broadcast %cst_43 : f32 to vector<2x32x8xf32>
    %96 = arith.maximumf %94, %95 : vector<2x32x8xf32>
    %97 = vector.shape_cast %96 : vector<2x32x8xf32> to vector<64x8xf32>
    %c0_44 = arith.constant 0 : index
    %c0_45 = arith.constant 0 : index
    %98 = vector.load %arg17[%c0_44, %c0_45] : memref<8x16xf32, #tpu.memory_space<vmem>>, vector<8x16xf32>
    %cst_46 = arith.constant dense<0.000000e+00> : vector<64x16xf32>
    %99 = tpu.matmul %97, %98, %cst_46 {dimension_numbers = #tpu.dot_dimension_numbers<[1], [0], [0], [1], [0, 0, 1, 1], [], []>} : vector<64x8xf32>, vector<8x16xf32>, vector<64x16xf32> -> vector<64x16xf32>
    %100 = vector.shape_cast %99 : vector<64x16xf32> to vector<2x32x16xf32>
    %cst_47 = arith.constant 0.000000e+00 : f32
    %101 = vector.broadcast %cst_47 : f32 to vector<2x32x1xf32>
    %102 = vector.extract_strided_slice %100 {offsets = [0, 0, 0], sizes = [2, 32, 15], strides = [1, 1, 1]} : vector<2x32x16xf32> to vector<2x32x15xf32>
    %103 = tpu.concatenate %101, %102 in 2 : vector<2x32x1xf32>, vector<2x32x15xf32> -> vector<2x32x16xf32>
    %cst_48 = arith.constant 0.000000e+00 : f32
    %104 = vector.broadcast %cst_48 : f32 to vector<2x32x1xf32>
    %105 = vector.extract_strided_slice %100 {offsets = [0, 0, 1], sizes = [2, 32, 15], strides = [1, 1, 1]} : vector<2x32x16xf32> to vector<2x32x15xf32>
    %106 = tpu.concatenate %105, %104 in 2 : vector<2x32x15xf32>, vector<2x32x1xf32> -> vector<2x32x16xf32>
    %107 = tpu.concatenate %103, %100, %106 in 1 : vector<2x32x16xf32>, vector<2x32x16xf32>, vector<2x32x16xf32> -> vector<2x96x16xf32>
    %c0_49 = arith.constant 0 : index
    %c0_50 = arith.constant 0 : index
    %108 = vector.load %arg10[%c0_49, %c0_50] : memref<16x96xbf16, #tpu.memory_space<vmem>>, vector<16x96xbf16>
    %109 = vector.shape_cast %108 : vector<16x96xbf16> to vector<1x16x96xbf16>
    %110 = vector.shape_cast %109 : vector<1x16x96xbf16> to vector<1x16x96xbf16>
    %111 = vector.broadcast %110 : vector<1x16x96xbf16> to vector<2x16x96xbf16>
    %112 = arith.truncf %107 : vector<2x96x16xf32> to vector<2x96x16xbf16>
    "tpu.trace_start"() <{level = 10 : i32, message = "nok,nkl->nol"}> : () -> ()
    %cst_51 = arith.constant dense<0.000000e+00> : vector<2x16x16xf32>
    %113 = tpu.matmul %111, %112, %cst_51 {dimension_numbers = #tpu.dot_dimension_numbers<[2], [1], [1], [2], [0, 0, 0, 1, 1, 2], [0], [0]>} : vector<2x16x96xbf16>, vector<2x96x16xbf16>, vector<2x16x16xf32> -> vector<2x16x16xf32>
    "tpu.trace_stop"() : () -> ()
    %c0_52 = arith.constant 0 : index
    %c0_53 = arith.constant 0 : index
    %114 = vector.load %arg11[%c0_52, %c0_53] : memref<16x1xf32, #tpu.memory_space<vmem>>, vector<16x1xf32>
    %115 = vector.shape_cast %114 : vector<16x1xf32> to vector<1x16x1xf32>
    %116 = vector.broadcast %115 : vector<1x16x1xf32> to vector<2x16x16xf32>
    %117 = arith.addf %113, %116 : vector<2x16x16xf32>
    %cst_54 = arith.constant 0.000000e+00 : f32
    %118 = vector.broadcast %cst_54 : f32 to vector<2x16x16xf32>
    %119 = arith.maximumf %117, %118 : vector<2x16x16xf32>
    %cst_55 = arith.constant 0.000000e+00 : f32
    %120 = vector.broadcast %cst_55 : f32 to vector<2x16x1xf32>
    %121 = vector.extract_strided_slice %119 {offsets = [0, 0, 0], sizes = [2, 16, 15], strides = [1, 1, 1]} : vector<2x16x16xf32> to vector<2x16x15xf32>
    %122 = tpu.concatenate %120, %121 in 2 : vector<2x16x1xf32>, vector<2x16x15xf32> -> vector<2x16x16xf32>
    %cst_56 = arith.constant 0.000000e+00 : f32
    %123 = vector.broadcast %cst_56 : f32 to vector<2x16x1xf32>
    %124 = vector.extract_strided_slice %119 {offsets = [0, 0, 1], sizes = [2, 16, 15], strides = [1, 1, 1]} : vector<2x16x16xf32> to vector<2x16x15xf32>
    %125 = tpu.concatenate %124, %123 in 2 : vector<2x16x15xf32>, vector<2x16x1xf32> -> vector<2x16x16xf32>
    %126 = tpu.concatenate %122, %119, %125 in 1 : vector<2x16x16xf32>, vector<2x16x16xf32>, vector<2x16x16xf32> -> vector<2x48x16xf32>
    %c0_57 = arith.constant 0 : index
    %c0_58 = arith.constant 0 : index
    %127 = vector.load %arg12[%c0_57, %c0_58] : memref<1x48xbf16, #tpu.memory_space<vmem>>, vector<1x48xbf16>
    %128 = vector.shape_cast %127 : vector<1x48xbf16> to vector<1x1x48xbf16>
    %129 = vector.shape_cast %128 : vector<1x1x48xbf16> to vector<1x1x48xbf16>
    %130 = vector.broadcast %129 : vector<1x1x48xbf16> to vector<2x1x48xbf16>
    %131 = arith.truncf %126 : vector<2x48x16xf32> to vector<2x48x16xbf16>
    "tpu.trace_start"() <{level = 10 : i32, message = "nok,nkl->nol"}> : () -> ()
    %cst_59 = arith.constant dense<0.000000e+00> : vector<2x1x16xf32>
    %132 = tpu.matmul %130, %131, %cst_59 {dimension_numbers = #tpu.dot_dimension_numbers<[2], [1], [1], [2], [0, 0, 0, 1, 1, 2], [0], [0]>} : vector<2x1x48xbf16>, vector<2x48x16xbf16>, vector<2x1x16xf32> -> vector<2x1x16xf32>
    "tpu.trace_stop"() : () -> ()
    %c0_60 = arith.constant 0 : index
    %c0_61 = arith.constant 0 : index
    %133 = vector.load %arg13[%c0_60, %c0_61] : memref<1x1xf32, #tpu.memory_space<vmem>>, vector<1x1xf32>
    %134 = vector.shape_cast %133 : vector<1x1xf32> to vector<1x1x1xf32>
    %135 = vector.broadcast %134 : vector<1x1x1xf32> to vector<2x1x16xf32>
    %136 = arith.addf %132, %135 : vector<2x1x16xf32>
    %cst_62 = arith.constant 0.000000e+00 : f32
    %137 = vector.broadcast %cst_62 : f32 to vector<2x1x16xf32>
    %138 = arith.subf %137, %136 : vector<2x1x16xf32>
    %139 = math.exp %138 : vector<2x1x16xf32>
    %cst_63 = arith.constant 1.000000e+00 : f32
    %140 = vector.broadcast %cst_63 : f32 to vector<2x1x16xf32>
    %141 = arith.addf %140, %139 : vector<2x1x16xf32>
    %cst_64 = arith.constant 1.000000e+00 : f32
    %142 = vector.broadcast %cst_64 : f32 to vector<2x1x16xf32>
    %143 = arith.divf %142, %141 : vector<2x1x16xf32>
    %c0_65 = arith.constant 0 : index
    %c0_66 = arith.constant 0 : index
    %c0_67 = arith.constant 0 : index
    %144 = vector.load %arg18[%c0_65, %c0_66, %c0_67] : memref<2x1x16xf32, #tpu.memory_space<vmem>>, vector<2x1x16xf32>
    tpu.vector_store %arg18[%c0_65, %c0_66, %c0_67], %143 {strides = array<i32>} : memref<2x1x16xf32, #tpu.memory_space<vmem>>, vector<2x1x16xf32>,
    return
  }
  func.func @transform_0(%arg0: i32) -> (i32, i32, i32) {
    %c0_i32 = arith.constant 0 : i32
    %c0_i32_0 = arith.constant 0 : i32
    %c0_i32_1 = arith.constant 0 : i32
    return %arg0, %c0_i32, %c0_i32_0 : i32, i32, i32
  }
  func.func @transform_1(%arg0: i32) -> (i32, i32) {
    %c0_i32 = arith.constant 0 : i32
    %c0_i32_0 = arith.constant 0 : i32
    %c0_i32_1 = arith.constant 0 : i32
    return %c0_i32, %c0_i32_0 : i32, i32
  }
  func.func @transform_2(%arg0: i32) -> (i32, i32) {
    %c0_i32 = arith.constant 0 : i32
    %c0_i32_0 = arith.constant 0 : i32
    %c0_i32_1 = arith.constant 0 : i32
    return %c0_i32, %c0_i32_0 : i32, i32
  }
  func.func @transform_3(%arg0: i32) -> (i32, i32) {
    %c0_i32 = arith.constant 0 : i32
    %c0_i32_0 = arith.constant 0 : i32
    %c0_i32_1 = arith.constant 0 : i32
    return %c0_i32, %c0_i32_0 : i32, i32
  }
  func.func @transform_4(%arg0: i32) -> (i32, i32) {
    %c0_i32 = arith.constant 0 : i32
    %c0_i32_0 = arith.constant 0 : i32
    %c0_i32_1 = arith.constant 0 : i32
    return %c0_i32, %c0_i32_0 : i32, i32
  }
  func.func @transform_5(%arg0: i32) -> (i32, i32) {
    %c0_i32 = arith.constant 0 : i32
    %c0_i32_0 = arith.constant 0 : i32
    %c0_i32_1 = arith.constant 0 : i32
    return %c0_i32, %c0_i32_0 : i32, i32
  }
  func.func @transform_6(%arg0: i32) -> (i32, i32) {
    %c0_i32 = arith.constant 0 : i32
    %c0_i32_0 = arith.constant 0 : i32
    %c0_i32_1 = arith.constant 0 : i32
    return %c0_i32, %c0_i32_0 : i32, i32
  }
  func.func @transform_7(%arg0: i32) -> (i32, i32) {
    %c0_i32 = arith.constant 0 : i32
    %c0_i32_0 = arith.constant 0 : i32
    %c0_i32_1 = arith.constant 0 : i32
    return %c0_i32, %c0_i32_0 : i32, i32
  }
  func.func @transform_8(%arg0: i32) -> (i32, i32) {
    %c0_i32 = arith.constant 0 : i32
    %c0_i32_0 = arith.constant 0 : i32
    %c0_i32_1 = arith.constant 0 : i32
    return %c0_i32, %c0_i32_0 : i32, i32
  }
  func.func @transform_9(%arg0: i32) -> (i32, i32) {
    %c0_i32 = arith.constant 0 : i32
    %c0_i32_0 = arith.constant 0 : i32
    %c0_i32_1 = arith.constant 0 : i32
    return %c0_i32, %c0_i32_0 : i32, i32
  }
  func.func @transform_10(%arg0: i32) -> (i32, i32) {
    %c0_i32 = arith.constant 0 : i32
    %c0_i32_0 = arith.constant 0 : i32
    %c0_i32_1 = arith.constant 0 : i32
    return %c0_i32, %c0_i32_0 : i32, i32
  }
  func.func @transform_11(%arg0: i32) -> (i32, i32) {
    %c0_i32 = arith.constant 0 : i32
    %c0_i32_0 = arith.constant 0 : i32
    %c0_i32_1 = arith.constant 0 : i32
    return %c0_i32, %c0_i32_0 : i32, i32
  }
  func.func @transform_12(%arg0: i32) -> (i32, i32) {
    %c0_i32 = arith.constant 0 : i32
    %c0_i32_0 = arith.constant 0 : i32
    %c0_i32_1 = arith.constant 0 : i32
    return %c0_i32, %c0_i32_0 : i32, i32
  }
  func.func @transform_13(%arg0: i32) -> (i32, i32) {
    %c0_i32 = arith.constant 0 : i32
    %c0_i32_0 = arith.constant 0 : i32
    %c0_i32_1 = arith.constant 0 : i32
    return %c0_i32, %c0_i32_0 : i32, i32
  }
  func.func @transform_14(%arg0: i32) -> (i32, i32) {
    %c0_i32 = arith.constant 0 : i32
    %c0_i32_0 = arith.constant 0 : i32
    %c0_i32_1 = arith.constant 0 : i32
    return %c0_i32, %c0_i32_0 : i32, i32
  }
  func.func @transform_15(%arg0: i32) -> (i32, i32) {
    %c0_i32 = arith.constant 0 : i32
    %c0_i32_0 = arith.constant 0 : i32
    %c0_i32_1 = arith.constant 0 : i32
    return %c0_i32, %c0_i32_0 : i32, i32
  }
  func.func @transform_16(%arg0: i32) -> (i32, i32) {
    %c0_i32 = arith.constant 0 : i32
    %c0_i32_0 = arith.constant 0 : i32
    %c0_i32_1 = arith.constant 0 : i32
    return %c0_i32, %c0_i32_0 : i32, i32
  }
  func.func @transform_17(%arg0: i32) -> (i32, i32, i32) {
    %c0_i32 = arith.constant 0 : i32
    %c0_i32_0 = arith.constant 0 : i32
    %c0_i32_1 = arith.constant 0 : i32
    return %arg0, %c0_i32, %c0_i32_0 : i32, i32, i32
  }
}

</mosaic_0001>

<llo_original>
// kernel: cnn_autoencoder_forward.1
$region0: #{cnn_autoencoder_forward.1}
  #allocation0 [shape = 'u32[]', space=smem, size = 0x4, offset = 0x4, fixed_abs, tag = 'smem constant byte address 0x4 - core index']
  #allocation1 [shape = 'u32[144,128]{1,0:T(1,128)}', space=vmem, size = 0x12000, scoped, tag = 'internal scratch']
  #allocation2 [shape = 'f32[1,1]{1,0:T(1,128)S(1)}', space=vmem, size = 0x200, scoped, tag = 'scoped memory for cnn_autoencoder_forward.1']
  %s0 = inlined_call_operand.vmem [shape: f32[2,1,16], index: 0, kind: input, shape index: {}]
  %s1 = inlined_call_operand.vmem [shape: bf16[16,3], index: 1, kind: input, shape index: {}]
  %s2 = inlined_call_operand.vmem [shape: f32[16,1], index: 2, kind: input, shape index: {}]
  %s3 = inlined_call_operand.vmem [shape: bf16[32,48], index: 3, kind: input, shape index: {}]
  %s4 = inlined_call_operand.vmem [shape: f32[32,1], index: 4, kind: input, shape index: {}]
  %s5 = inlined_call_operand.vmem [shape: bf16[64,96], index: 5, kind: input, shape index: {}]
  %s6 = inlined_call_operand.vmem [shape: f32[64,1], index: 6, kind: input, shape index: {}]
  %s7 = inlined_call_operand.vmem [shape: bf16[32,192], index: 7, kind: input, shape index: {}]
  %s8 = inlined_call_operand.vmem [shape: f32[32,1], index: 8, kind: input, shape index: {}]
  %s9 = inlined_call_operand.vmem [shape: bf16[16,96], index: 9, kind: input, shape index: {}]
  %s10 = inlined_call_operand.vmem [shape: f32[16,1], index: 10, kind: input, shape index: {}]
  %s11 = inlined_call_operand.vmem [shape: bf16[1,48], index: 11, kind: input, shape index: {}]
  %s12 = inlined_call_operand.<no memory space> [shape: f32[1,1], index: 12, kind: input, shape index: {}]
  %s13 = inlined_call_operand.vmem [shape: f32[16,8], index: 13, kind: input, shape index: {}]
  %s14 = inlined_call_operand.vmem [shape: f32[8,4], index: 14, kind: input, shape index: {}]
  %s15 = inlined_call_operand.vmem [shape: f32[4,8], index: 15, kind: input, shape index: {}]
  %s16 = inlined_call_operand.vmem [shape: f32[8,16], index: 16, kind: input, shape index: {}]
  %s17 = inlined_call_operand.hbm [shape: f32[2,1,16], index: 17, kind: output, shape index: {}]
  %s18 = sld [smem:[#allocation0]]
  $region78: #{cnn_autoencoder_forward.1} parent=0
    _
  %s20 = ssub.s32 1, %s18
  %s21 = scalar_select 0, %s20, %s18
  %v22 = vstv %s12
  %23 = vst [vmem:[#allocation2] sm:$0x1] %v22
  $region1: #{cnn_autoencoder_forward.1} parent=0
    #allocation3 [shape = 'u8[1024]{0}', space=vmem, size = 0x400, scoped, tag = 'output window, operand 0, single buffered']
    #allocation4 [shape = 's32[1]{0}', space=sflag, size = 0x4, scoped, tag = 'scoped memory for cnn_autoencoder_forward.1']
    %24 = vsyncpa [#allocation4], 0
    // Predicated region
    $region2: #{cnn_autoencoder_forward.1} parent=1 // pred_check
      _
    $region3: #{cnn_autoencoder_forward.1} parent=1 // pred_check_branch
      %26 = sbr.rel (0) target = $region5
    $region4: #{cnn_autoencoder_forward.1} parent=1 // pred_region
      _
    $region5: #{cnn_autoencoder_forward.1} parent=1 // pred_fallthru
      _
    // Predicated region
    $region6: #{cnn_autoencoder_forward.1} parent=1 // pred_check
      _
    $region7: #{cnn_autoencoder_forward.1} parent=1 // pred_check_branch
      %28 = sbr.rel (0) target = $region9
    $region8: #{cnn_autoencoder_forward.1} parent=1 // pred_region
      _
    $region9: #{cnn_autoencoder_forward.1} parent=1 // pred_fallthru
      _
    // Predicated region
    $region10: #{cnn_autoencoder_forward.1} parent=1 // pred_check
      _
    $region11: #{cnn_autoencoder_forward.1} parent=1 // pred_check_branch
      %30 = sbr.rel (0) target = $region13
    $region12: #{cnn_autoencoder_forward.1} parent=1 // pred_region
      _
    $region13: #{cnn_autoencoder_forward.1} parent=1 // pred_fallthru
      _
    // Predicated region
    $region14: #{cnn_autoencoder_forward.1} parent=1 // pred_check
      _
    $region15: #{cnn_autoencoder_forward.1} parent=1 // pred_check_branch
      %32 = sbr.rel (0) target = $region17
    $region16: #{cnn_autoencoder_forward.1} parent=1 // pred_region
      _
    $region17: #{cnn_autoencoder_forward.1} parent=1 // pred_fallthru
      _
    // Predicated region
    $region18: #{cnn_autoencoder_forward.1} parent=1 // pred_check
      _
    $region19: #{cnn_autoencoder_forward.1} parent=1 // pred_check_branch
      %34 = sbr.rel (0) target = $region21
    $region20: #{cnn_autoencoder_forward.1} parent=1 // pred_region
      _
    $region21: #{cnn_autoencoder_forward.1} parent=1 // pred_fallthru
      _
    // Predicated region
    $region22: #{cnn_autoencoder_forward.1} parent=1 // pred_check
      _
    $region23: #{cnn_autoencoder_forward.1} parent=1 // pred_check_branch
      %36 = sbr.rel (0) target = $region25
    $region24: #{cnn_autoencoder_forward.1} parent=1 // pred_region
      _
    $region25: #{cnn_autoencoder_forward.1} parent=1 // pred_fallthru
      _
    // Predicated region
    $region26: #{cnn_autoencoder_forward.1} parent=1 // pred_check
      _
    $region27: #{cnn_autoencoder_forward.1} parent=1 // pred_check_branch
      %38 = sbr.rel (0) target = $region29
    $region28: #{cnn_autoencoder_forward.1} parent=1 // pred_region
      _
    $region29: #{cnn_autoencoder_forward.1} parent=1 // pred_fallthru
      _
    // Predicated region
    $region30: #{cnn_autoencoder_forward.1} parent=1 // pred_check
      _
    $region31: #{cnn_autoencoder_forward.1} parent=1 // pred_check_branch
      %40 = sbr.rel (0) target = $region33
    $region32: #{cnn_autoencoder_forward.1} parent=1 // pred_region
      _
    $region33: #{cnn_autoencoder_forward.1} parent=1 // pred_fallthru
      _
    // Predicated region
    $region34: #{cnn_autoencoder_forward.1} parent=1 // pred_check
      _
    $region35: #{cnn_autoencoder_forward.1} parent=1 // pred_check_branch
      %42 = sbr.rel (0) target = $region37
    $region36: #{cnn_autoencoder_forward.1} parent=1 // pred_region
      _
    $region37: #{cnn_autoencoder_forward.1} parent=1 // pred_fallthru
      _
    // Predicated region
    $region38: #{cnn_autoencoder_forward.1} parent=1 // pred_check
      _
    $region39: #{cnn_autoencoder_forward.1} parent=1 // pred_check_branch
      %44 = sbr.rel (0) target = $region41
    $region40: #{cnn_autoencoder_forward.1} parent=1 // pred_region
      _
    $region41: #{cnn_autoencoder_forward.1} parent=1 // pred_fallthru
      _
    // Predicated region
    $region42: #{cnn_autoencoder_forward.1} parent=1 // pred_check
      _
    $region43: #{cnn_autoencoder_forward.1} parent=1 // pred_check_branch
      %46 = sbr.rel (0) target = $region45
    $region44: #{cnn_autoencoder_forward.1} parent=1 // pred_region
      _
    $region45: #{cnn_autoencoder_forward.1} parent=1 // pred_fallthru
      _
    // Predicated region
    $region46: #{cnn_autoencoder_forward.1} parent=1 // pred_check
      _
    $region47: #{cnn_autoencoder_forward.1} parent=1 // pred_check_branch
      %48 = sbr.rel (0) target = $region49
    $region48: #{cnn_autoencoder_forward.1} parent=1 // pred_region
      _
    $region49: #{cnn_autoencoder_forward.1} parent=1 // pred_fallthru
      _
    // Predicated region
    $region50: #{cnn_autoencoder_forward.1} parent=1 // pred_check
      _
    $region51: #{cnn_autoencoder_forward.1} parent=1 // pred_check_branch
      %50 = sbr.rel (0) target = $region53
    $region52: #{cnn_autoencoder_forward.1} parent=1 // pred_region
      _
    $region53: #{cnn_autoencoder_forward.1} parent=1 // pred_fallthru
      _
    // Predicated region
    $region54: #{cnn_autoencoder_forward.1} parent=1 // pred_check
      _
    $region55: #{cnn_autoencoder_forward.1} parent=1 // pred_check_branch
      %52 = sbr.rel (0) target = $region57
    $region56: #{cnn_autoencoder_forward.1} parent=1 // pred_region
      _
    $region57: #{cnn_autoencoder_forward.1} parent=1 // pred_fallthru
      _
    // Predicated region
    $region58: #{cnn_autoencoder_forward.1} parent=1 // pred_check
      _
    $region59: #{cnn_autoencoder_forward.1} parent=1 // pred_check_branch
      %54 = sbr.rel (0) target = $region61
    $region60: #{cnn_autoencoder_forward.1} parent=1 // pred_region
      _
    $region61: #{cnn_autoencoder_forward.1} parent=1 // pred_fallthru
      _
    // Predicated region
    $region62: #{cnn_autoencoder_forward.1} parent=1 // pred_check
      _
    $region63: #{cnn_autoencoder_forward.1} parent=1 // pred_check_branch
      %56 = sbr.rel (0) target = $region65
    $region64: #{cnn_autoencoder_forward.1} parent=1 // pred_region
      _
    $region65: #{cnn_autoencoder_forward.1} parent=1 // pred_fallthru
      _
    // Predicated region
    $region66: #{cnn_autoencoder_forward.1} parent=1 // pred_check
      _
    $region67: #{cnn_autoencoder_forward.1} parent=1 // pred_check_branch
      %58 = sbr.rel (0) target = $region69
    $region68: #{cnn_autoencoder_forward.1} parent=1 // pred_region
      _
    $region69: #{cnn_autoencoder_forward.1} parent=1 // pred_fallthru
      _
    %v60 = vld [vmem:[%s0] sm:$0x1]
    %v61 = vld [vmem:[%s0 + $0x1] sm:$0x1]
    %v64 = vlaneseq
    %v65 = vshrl.u32 %v64, 7
    %v66 = vsub.s32 0, %v65
    %v67 = vrot.slane %v60, %v66
    %v68 = vlaneseq
    %v69 = vshrl.u32 %v68, 7
    %v70 = vsub.s32 0, %v69
    %v71 = vrot.slane %v61, %v70
    %72 = vrot.lane.b32.xlu0 %v67, 1
    %v73 = vpop.permute.xlu0 %72
    %74 = vrot.lane.b32.xlu0 %v71, 1
    %v75 = vpop.permute.xlu0 %74
    %vm78 = vcmask 7168
    %v79 = vsel %vm78, 0.0, %v73
    %v80 = vsel %vm78, 0.0, %v75
    %81 = vrot.lane.b32.xlu0 %v67, 127
    %v82 = vpop.permute.xlu0 %81
    %83 = vrot.lane.b32.xlu0 %v71, 127
    %v84 = vpop.permute.xlu0 %83
    %vm87 = vcmask 121856
    %v88 = vsel %vm87, %v82, 0.0
    %v89 = vsel %vm87, %v84, 0.0
    %v94 = vrot.slane %v88, 6
    %v95 = vrot.slane %v89, 6
    %vm98 = vcmask 1040384
    %v99 = vsel %vm98, %v79, %v67
    %v100 = vsel %vm98, %v80, %v71
    %vm101 = vcmask 1041408
    %v102 = vsel %vm101, %v99, %v94
    %v103 = vsel %vm101, %v100, %v95
    %v104 = vld [vmem:[%s1] sm:$0xf]
    %v105 = vld [vmem:[%s1 + $0x4] sm:$0xf]
    %v106 = vpack.c.bf16 %v102, %v102
    %v107 = vpack.c.bf16 %v103, %v103
    %v108 = vld [vmem:[%s2] sm:$0xff]
    %v109 = vld [vmem:[%s2 + $0x8] sm:$0xff]
    %111 = vset.pattern.permute.xlu0 0
    %112 = vperm.xlu0 %111, %v108
    %v113 = vpop.permute.xlu0 %112
    %116 = vset.pattern.permute.xlu0 0
    %117 = vperm.xlu0 %116, %v109
    %v118 = vpop.permute.xlu0 %117
    %v122 = vunpack.c.l.b16 %v104
    %v123 = vunpack.c.l.b16 %v105
    %v124 = vpack.c.b16 %v123, %v122
    %vm125 = vcmask 23552
    %v127 = vsel %vm125, %v124, 0
    %v129 = vsel %vm98, 4294967295, 65535
    %v130 = vsel %vm101, %v129, 0
    %v132 = vand.u32 %v106, %v130
    %134 = vmatprep.subr.bf16.mxu0 0
    %135 = vmatpush1.bf16.msra.mxu0 0
    %136 = vmatprep.subr.bf16.mxu0 0
    %137 = vmatpush1.bf16.msra.mxu0 0
    %138 = vmatprep.subr.bf16.mxu0 0
    %139 = vmatpush1.bf16.msra.mxu0 0
    %140 = vmatprep.subr.bf16.mxu0 0
    %141 = vmatpush1.bf16.msra.mxu0 0
    %142 = vmatprep.subr.bf16.mxu0 0
    %143 = vmatpush1.bf16.msra.mxu0 0
    %144 = vmatprep.subr.bf16.mxu0 0
    %145 = vmatpush1.bf16.msra.mxu0 0
    %146 = vmatprep.subr.bf16.mxu0 0
    %147 = vmatpush1.bf16.msra.mxu0 0
    %148 = vmatprep.subr.bf16.mxu0 0
    %149 = vmatpush1.bf16.msra.mxu0 %v132
    %150 = vmatprep.subr.bf16.mxu0 0
    %151 = vmatpush2.bf16.msra.mxu0 0
    %152 = vmatprep.subr.bf16.mxu0 0
    %153 = vmatpush2.bf16.msra.mxu0 0
    %154 = vmatprep.subr.bf16.mxu0 0
    %155 = vmatpush2.bf16.msra.mxu0 0
    %156 = vmatprep.subr.bf16.mxu0 0
    %157 = vmatpush2.bf16.msra.mxu0 0
    %158 = vmatprep.subr.bf16.mxu0 0
    %159 = vmatpush2.bf16.msra.mxu0 0
    %160 = vmatprep.subr.bf16.mxu0 0
    %161 = vmatpush2.bf16.msra.mxu0 0
    %162 = vmatprep.subr.bf16.mxu0 0
    %163 = vmatpush2.bf16.msra.mxu0 0
    %164 = vmatprep.subr.bf16.mxu0 0
    %165 = vmatpush2.bf16.msra.mxu0 0
    %166 = vmatprep.mubr.bf16.mxu0 0
    %167 = vmatmul.mubr.bf16.gmra.mxu0 %v127
    %v168 = vpop.f32.mrf.mxu0
    %v169 = vadd.f32 %v113, %v168
    %v170 = vpop.f32.mrf.mxu0
    %v171 = vpop.f32.mrf.mxu0
    %v172 = vadd.f32 %v118, %v171
    %v173 = vpop.f32.mrf.mxu0
    %174 = vdwg.mxu0
    %v176 = vand.u32 %v107, %v130
    %178 = vmatprep.subr.bf16.mxu0 0
    %179 = vmatpush1.bf16.msra.mxu0 0
    %180 = vmatprep.subr.bf16.mxu0 0
    %181 = vmatpush1.bf16.msra.mxu0 0
    %182 = vmatprep.subr.bf16.mxu0 0
    %183 = vmatpush1.bf16.msra.mxu0 0
    %184 = vmatprep.subr.bf16.mxu0 0
    %185 = vmatpush1.bf16.msra.mxu0 0
    %186 = vmatprep.subr.bf16.mxu0 0
    %187 = vmatpush1.bf16.msra.mxu0 0
    %188 = vmatprep.subr.bf16.mxu0 0
    %189 = vmatpush1.bf16.msra.mxu0 0
    %190 = vmatprep.subr.bf16.mxu0 0
    %191 = vmatpush1.bf16.msra.mxu0 0
    %192 = vmatprep.subr.bf16.mxu0 0
    %193 = vmatpush1.bf16.msra.mxu0 %v176
    %194 = vmatprep.subr.bf16.mxu0 0
    %195 = vmatpush2.bf16.msra.mxu0 0
    %196 = vmatprep.subr.bf16.mxu0 0
    %197 = vmatpush2.bf16.msra.mxu0 0
    %198 = vmatprep.subr.bf16.mxu0 0
    %199 = vmatpush2.bf16.msra.mxu0 0
    %200 = vmatprep.subr.bf16.mxu0 0
    %201 = vmatpush2.bf16.msra.mxu0 0
    %202 = vmatprep.subr.bf16.mxu0 0
    %203 = vmatpush2.bf16.msra.mxu0 0
    %204 = vmatprep.subr.bf16.mxu0 0
    %205 = vmatpush2.bf16.msra.mxu0 0
    %206 = vmatprep.subr.bf16.mxu0 0
    %207 = vmatpush2.bf16.msra.mxu0 0
    %208 = vmatprep.subr.bf16.mxu0 0
    %209 = vmatpush2.bf16.msra.mxu0 0
    %210 = vmatprep.mubr.bf16.mxu0 0
    %211 = vmatmul.mubr.bf16.gmra.mxu0 %v127
    %v212 = vpop.f32.mrf.mxu0
    %v213 = vadd.f32 %v113, %v212
    %v214 = vpop.f32.mrf.mxu0
    %v215 = vpop.f32.mrf.mxu0
    %v216 = vadd.f32 %v118, %v215
    %v217 = vpop.f32.mrf.mxu0
    %218 = vdwg.mxu0
    %v219 = vmax.f32 %v169, 0.0
    %v220 = vmax.f32 %v172, 0.0
    %v221 = vmax.f32 %v213, 0.0
    %v222 = vmax.f32 %v216, 0.0
    %227 = vrot.lane.b32.xlu0 %v219, 127
    %v228 = vpop.permute.xlu0 %227
    %229 = vrot.lane.b32.xlu0 %v220, 127
    %v230 = vpop.permute.xlu0 %229
    %231 = vrot.lane.b32.xlu0 %v221, 127
    %v232 = vpop.permute.xlu0 %231
    %233 = vrot.lane.b32.xlu0 %v222, 127
    %v234 = vpop.permute.xlu0 %233
    %v239 = vsel %vm87, %v228, 0.0
    %v240 = vsel %vm87, %v230, 0.0
    %v241 = vsel %vm87, %v232, 0.0
    %v242 = vsel %vm87, %v234, 0.0
    %v243 = vmax.f32 %v219, %v239
    %v244 = vmax.f32 %v220, %v240
    %v245 = vmax.f32 %v221, %v241
    %v246 = vmax.f32 %v222, %v242
    %v247 = vld [vmem:[%s13] sm:$0xff]
    %v248 = vld [vmem:[%s13 + $0x8] sm:$0xff]
    %vm249 = vcmask 130048
    %v251 = vsel %vm249, %v243, 0
    %v254 = vsel %vm249, %v244, 0
    %v257 = vsel %vm249, %v245, 0
    %v260 = vsel %vm249, %v246, 0
    %262 = vmatprep.subr.mxu0 0.0
    %263 = vmatpush1.msra.mxu0 0.0
    %264 = vmatprep.subr.mxu0 0.0
    %265 = vmatpush1.msra.mxu0 0.0
    %266 = vmatprep.subr.mxu0 0.0
    %267 = vmatpush1.msra.mxu0 0.0
    %268 = vmatprep.subr.mxu0 0.0
    %269 = vmatpush1.msra.mxu0 0.0
    %270 = vmatprep.subr.mxu0 0.0
    %271 = vmatpush1.msra.mxu0 0.0
    %272 = vmatprep.subr.mxu0 0.0
    %273 = vmatpush1.msra.mxu0 0.0
    %274 = vmatprep.subr.mxu0 0.0
    %275 = vmatpush1.msra.mxu0 0.0
    %276 = vmatprep.subr.mxu0 0.0
    %277 = vmatpush1.msra.mxu0 0.0
    %278 = vmatprep.subr.mxu0 0.0
    %279 = vmatpush1.msra.mxu0 0.0
    %280 = vmatprep.subr.mxu0 0.0
    %281 = vmatpush1.msra.mxu0 0.0
    %282 = vmatprep.subr.mxu0 0.0
    %283 = vmatpush1.msra.mxu0 0.0
    %284 = vmatprep.subr.mxu0 0.0
    %285 = vmatpush1.msra.mxu0 0.0
    %286 = vmatprep.subr.mxu0 0.0
    %287 = vmatpush1.msra.mxu0 0.0
    %288 = vmatprep.subr.mxu0 0.0
    %289 = vmatpush1.msra.mxu0 0.0
    %290 = vmatprep.subr.mxu0 0.0
    %291 = vmatpush1.msra.mxu0 %v248
    %292 = vmatprep.subr.mxu0 0.0
    %293 = vmatpush1.msra.mxu0 %v247
    %294 = vmatprep.subr.mxu0 0.0
    %295 = vmatpush2.msra.mxu0 0.0
    %296 = vmatprep.subr.mxu0 0.0
    %297 = vmatpush2.msra.mxu0 0.0
    %298 = vmatprep.subr.mxu0 0.0
    %299 = vmatpush2.msra.mxu0 0.0
    %300 = vmatprep.subr.mxu0 0.0
    %301 = vmatpush2.msra.mxu0 0.0
    %302 = vmatprep.subr.mxu0 0.0
    %303 = vmatpush2.msra.mxu0 0.0
    %304 = vmatprep.subr.mxu0 0.0
    %305 = vmatpush2.msra.mxu0 0.0
    %306 = vmatprep.subr.mxu0 0.0
    %307 = vmatpush2.msra.mxu0 0.0
    %308 = vmatprep.subr.mxu0 0.0
    %309 = vmatpush2.msra.mxu0 0.0
    %310 = vmatprep.subr.mxu0 0.0
    %311 = vmatpush2.msra.mxu0 0.0
    %312 = vmatprep.subr.mxu0 0.0
    %313 = vmatpush2.msra.mxu0 0.0
    %314 = vmatprep.subr.mxu0 0.0
    %315 = vmatpush2.msra.mxu0 0.0
    %316 = vmatprep.subr.mxu0 0.0
    %317 = vmatpush2.msra.mxu0 0.0
    %318 = vmatprep.subr.mxu0 0.0
    %319 = vmatpush2.msra.mxu0 0.0
    %320 = vmatprep.subr.mxu0 0.0
    %321 = vmatpush2.msra.mxu0 0.0
    %322 = vmatprep.subr.mxu0 0.0
    %323 = vmatpush2.msra.mxu0 0.0
    %324 = vmatprep.subr.mxu0 0.0
    %325 = vmatpush2.msra.mxu0 0.0
    %326 = vmatprep.mubr.f32.mxu0 0.0
    %327 = vmatmul.mubr.f32.gmra.mxu0 %v251
    %v328 = vpop.f32.mrf.mxu0
    %v329 = vadd.f32 0.0, %v328
    %v330 = vpop.f32.mrf.mxu0
    %331 = vmatprep.mubr.f32.mxu0 0.0
    %332 = vmatmul.mubr.f32.gmra.mxu0 %v254
    %v333 = vpop.f32.mrf.mxu0
    %v334 = vadd.f32 0.0, %v333
    %v335 = vpop.f32.mrf.mxu0
    %336 = vmatprep.mubr.f32.mxu0 0.0
    %337 = vmatmul.mubr.f32.gmra.mxu0 %v257
    %v338 = vpop.f32.mrf.mxu0
    %v339 = vadd.f32 0.0, %v338
    %v340 = vpop.f32.mrf.mxu0
    %341 = vmatprep.mubr.f32.mxu0 0.0
    %342 = vmatmul.mubr.f32.gmra.mxu0 %v260
    %v343 = vpop.f32.mrf.mxu0
    %v344 = vadd.f32 0.0, %v343
    %v345 = vpop.f32.mrf.mxu0
    %346 = vdwg.mxu0
    %351 = vrot.lane.b32.xlu0 %v329, 1
    %v352 = vpop.permute.xlu0 %351
    %353 = vrot.lane.b32.xlu0 %v334, 1
    %v354 = vpop.permute.xlu0 %353
    %355 = vrot.lane.b32.xlu0 %v339, 1
    %v356 = vpop.permute.xlu0 %355
    %357 = vrot.lane.b32.xlu0 %v344, 1
    %v358 = vpop.permute.xlu0 %357
    %v363 = vsel %vm78, 0.0, %v352
    %v364 = vsel %vm78, 0.0, %v354
    %v365 = vsel %vm78, 0.0, %v356
    %v366 = vsel %vm78, 0.0, %v358
    %367 = vrot.lane.b32.xlu0 %v329, 127
    %v368 = vpop.permute.xlu0 %367
    %369 = vrot.lane.b32.xlu0 %v334, 127
    %v370 = vpop.permute.xlu0 %369
    %371 = vrot.lane.b32.xlu0 %v339, 127
    %v372 = vpop.permute.xlu0 %371
    %373 = vrot.lane.b32.xlu0 %v344, 127
    %v374 = vpop.permute.xlu0 %373
    %vm379 = vcmask 56320
    %v380 = vsel %vm379, %v368, 0.0
    %v381 = vsel %vm379, %v370, 0.0
    %v382 = vsel %vm379, %v372, 0.0
    %v383 = vsel %vm379, %v374, 0.0
    %v384 = vld [vmem:[%s3] sm:$0xf]
    %v385 = vld [vmem:[%s3 + $0x4] sm:$0xf]
    %v386 = vld [vmem:[%s3 + $0x8] sm:$0xf]
    %v387 = vld [vmem:[%s3 + $0xc] sm:$0xf]
    %v388 = vpack.c.bf16 %v364, %v363
    %v389 = vpack.c.bf16 %v334, %v329
    %v390 = vpack.c.bf16 %v381, %v380
    %v391 = vpack.c.bf16 %v366, %v365
    %v392 = vpack.c.bf16 %v344, %v339
    %v393 = vpack.c.bf16 %v383, %v382
    %v394 = vld [vmem:[%s4] sm:$0xff]
    %v395 = vld [vmem:[%s4 + $0x8] sm:$0xff]
    %v396 = vld [vmem:[%s4 + $0x10] sm:$0xff]
    %v397 = vld [vmem:[%s4 + $0x18] sm:$0xff]
    %399 = vset.pattern.permute.xlu0 0
    %400 = vperm.xlu0 %399, %v394
    %v401 = vpop.permute.xlu0 %400
    %404 = vset.pattern.permute.xlu0 0
    %405 = vperm.xlu0 %404, %v395
    %v406 = vpop.permute.xlu0 %405
    %409 = vset.pattern.permute.xlu0 0
    %410 = vperm.xlu0 %409, %v396
    %v411 = vpop.permute.xlu0 %410
    %414 = vset.pattern.permute.xlu0 0
    %415 = vperm.xlu0 %414, %v397
    %v416 = vpop.permute.xlu0 %415
    %v422 = vunpack.c.l.b16 %v384
    %v423 = vunpack.c.l.b16 %v385
    %v424 = vunpack.c.l.b16 %v386
    %v425 = vunpack.c.l.b16 %v387
    %v426 = vpack.c.b16 %v423, %v422
    %v427 = vpack.c.b16 %v425, %v424
    %vm428 = vcmask 392192
    %v430 = vsel %vm428, %v426, 0
    %v433 = vsel %vm428, %v427, 0
    %435 = vmatprep.subr.bf16.mxu0 0
    %436 = vmatpush1.bf16.msra.mxu0 0
    %437 = vmatprep.subr.bf16.mxu0 0
    %438 = vmatpush1.bf16.msra.mxu0 0
    %439 = vmatprep.subr.bf16.mxu0 0
    %440 = vmatpush1.bf16.msra.mxu0 0
    %441 = vmatprep.subr.bf16.mxu0 0
    %442 = vmatpush1.bf16.msra.mxu0 0
    %443 = vmatprep.subr.bf16.mxu0 0
    %444 = vmatpush1.bf16.msra.mxu0 0
    %445 = vmatprep.subr.bf16.mxu0 0
    %446 = vmatpush1.bf16.msra.mxu0 %v390
    %447 = vmatprep.subr.bf16.mxu0 0
    %448 = vmatpush1.bf16.msra.mxu0 %v389
    %449 = vmatprep.subr.bf16.mxu0 0
    %450 = vmatpush1.bf16.msra.mxu0 %v388
    %451 = vmatprep.subr.bf16.mxu0 0
    %452 = vmatpush2.bf16.msra.mxu0 0
    %453 = vmatprep.subr.bf16.mxu0 0
    %454 = vmatpush2.bf16.msra.mxu0 0
    %455 = vmatprep.subr.bf16.mxu0 0
    %456 = vmatpush2.bf16.msra.mxu0 0
    %457 = vmatprep.subr.bf16.mxu0 0
    %458 = vmatpush2.bf16.msra.mxu0 0
    %459 = vmatprep.subr.bf16.mxu0 0
    %460 = vmatpush2.bf16.msra.mxu0 0
    %461 = vmatprep.subr.bf16.mxu0 0
    %462 = vmatpush2.bf16.msra.mxu0 0
    %463 = vmatprep.subr.bf16.mxu0 0
    %464 = vmatpush2.bf16.msra.mxu0 0
    %465 = vmatprep.subr.bf16.mxu0 0
    %466 = vmatpush2.bf16.msra.mxu0 0
    %467 = vmatprep.mubr.bf16.mxu0 0
    %468 = vmatmul.mubr.bf16.gmra.mxu0 %v430
    %v469 = vpop.f32.mrf.mxu0
    %v470 = vadd.f32 %v401, %v469
    %v471 = vpop.f32.mrf.mxu0
    %v472 = vpop.f32.mrf.mxu0
    %v473 = vadd.f32 %v406, %v472
    %v474 = vpop.f32.mrf.mxu0
    %475 = vmatprep.mubr.bf16.mxu0 0
    %476 = vmatmul.mubr.bf16.gmra.mxu0 %v433
    %v477 = vpop.f32.mrf.mxu0
    %v478 = vadd.f32 %v411, %v477
    %v479 = vpop.f32.mrf.mxu0
    %v480 = vpop.f32.mrf.mxu0
    %v481 = vadd.f32 %v416, %v480
    %v482 = vpop.f32.mrf.mxu0
    %483 = vdwg.mxu0
    %484 = vmatprep.subr.bf16.mxu0 0
    %485 = vmatpush1.bf16.msra.mxu0 0
    %486 = vmatprep.subr.bf16.mxu0 0
    %487 = vmatpush1.bf16.msra.mxu0 0
    %488 = vmatprep.subr.bf16.mxu0 0
    %489 = vmatpush1.bf16.msra.mxu0 0
    %490 = vmatprep.subr.bf16.mxu0 0
    %491 = vmatpush1.bf16.msra.mxu0 0
    %492 = vmatprep.subr.bf16.mxu0 0
    %493 = vmatpush1.bf16.msra.mxu0 0
    %494 = vmatprep.subr.bf16.mxu0 0
    %495 = vmatpush1.bf16.msra.mxu0 %v393
    %496 = vmatprep.subr.bf16.mxu0 0
    %497 = vmatpush1.bf16.msra.mxu0 %v392
    %498 = vmatprep.subr.bf16.mxu0 0
    %499 = vmatpush1.bf16.msra.mxu0 %v391
    %500 = vmatprep.subr.bf16.mxu0 0
    %501 = vmatpush2.bf16.msra.mxu0 0
    %502 = vmatprep.subr.bf16.mxu0 0
    %503 = vmatpush2.bf16.msra.mxu0 0
    %504 = vmatprep.subr.bf16.mxu0 0
    %505 = vmatpush2.bf16.msra.mxu0 0
    %506 = vmatprep.subr.bf16.mxu0 0
    %507 = vmatpush2.bf16.msra.mxu0 0
    %508 = vmatprep.subr.bf16.mxu0 0
    %509 = vmatpush2.bf16.msra.mxu0 0
    %510 = vmatprep.subr.bf16.mxu0 0
    %511 = vmatpush2.bf16.msra.mxu0 0
    %512 = vmatprep.subr.bf16.mxu0 0
    %513 = vmatpush2.bf16.msra.mxu0 0
    %514 = vmatprep.subr.bf16.mxu0 0
    %515 = vmatpush2.bf16.msra.mxu0 0
    %516 = vmatprep.mubr.bf16.mxu0 0
    %517 = vmatmul.mubr.bf16.gmra.mxu0 %v430
    %v518 = vpop.f32.mrf.mxu0
    %v519 = vadd.f32 %v401, %v518
    %v520 = vpop.f32.mrf.mxu0
    %v521 = vpop.f32.mrf.mxu0
    %v522 = vadd.f32 %v406, %v521
    %v523 = vpop.f32.mrf.mxu0
    %524 = vmatprep.mubr.bf16.mxu0 0
    %525 = vmatmul.mubr.bf16.gmra.mxu0 %v433
    %v526 = vpop.f32.mrf.mxu0
    %v527 = vadd.f32 %v411, %v526
    %v528 = vpop.f32.mrf.mxu0
    %v529 = vpop.f32.mrf.mxu0
    %v530 = vadd.f32 %v416, %v529
    %v531 = vpop.f32.mrf.mxu0
    %532 = vdwg.mxu0
    %v533 = vmax.f32 %v470, 0.0
    %v534 = vmax.f32 %v473, 0.0
    %v535 = vmax.f32 %v478, 0.0
    %v536 = vmax.f32 %v481, 0.0
    %v537 = vmax.f32 %v519, 0.0
    %v538 = vmax.f32 %v522, 0.0
    %v539 = vmax.f32 %v527, 0.0
    %v540 = vmax.f32 %v530, 0.0
    %549 = vrot.lane.b32.xlu0 %v533, 127
    %v550 = vpop.permute.xlu0 %549
    %551 = vrot.lane.b32.xlu0 %v534, 127
    %v552 = vpop.permute.xlu0 %551
    %553 = vrot.lane.b32.xlu0 %v535, 127
    %v554 = vpop.permute.xlu0 %553
    %555 = vrot.lane.b32.xlu0 %v536, 127
    %v556 = vpop.permute.xlu0 %555
    %557 = vrot.lane.b32.xlu0 %v537, 127
    %v558 = vpop.permute.xlu0 %557
    %559 = vrot.lane.b32.xlu0 %v538, 127
    %v560 = vpop.permute.xlu0 %559
    %561 = vrot.lane.b32.xlu0 %v539, 127
    %v562 = vpop.permute.xlu0 %561
    %563 = vrot.lane.b32.xlu0 %v540, 127
    %v564 = vpop.permute.xlu0 %563
    %v573 = vsel %vm379, %v550, 0.0
    %v574 = vsel %vm379, %v552, 0.0
    %v575 = vsel %vm379, %v554, 0.0
    %v576 = vsel %vm379, %v556, 0.0
    %v577 = vsel %vm379, %v558, 0.0
    %v578 = vsel %vm379, %v560, 0.0
    %v579 = vsel %vm379, %v562, 0.0
    %v580 = vsel %vm379, %v564, 0.0
    %v581 = vmax.f32 %v533, %v573
    %v582 = vmax.f32 %v534, %v574
    %v583 = vmax.f32 %v535, %v575
    %v584 = vmax.f32 %v536, %v576
    %v585 = vmax.f32 %v537, %v577
    %v586 = vmax.f32 %v538, %v578
    %v587 = vmax.f32 %v539, %v579
    %v588 = vmax.f32 %v540, %v580
    %v589 = vld [vmem:[%s14] sm:$0xff]
    %vm590 = vcmask 64512
    %v592 = vsel %vm590, %v581, 0
    %v595 = vsel %vm590, %v582, 0
    %v598 = vsel %vm590, %v583, 0
    %v601 = vsel %vm590, %v584, 0
    %v604 = vsel %vm590, %v585, 0
    %v607 = vsel %vm590, %v586, 0
    %v610 = vsel %vm590, %v587, 0
    %v613 = vsel %vm590, %v588, 0
    %615 = vmatprep.subr.mxu0 0.0
    %616 = vmatpush1.msra.mxu0 0.0
    %617 = vmatprep.subr.mxu0 0.0
    %618 = vmatpush1.msra.mxu0 0.0
    %619 = vmatprep.subr.mxu0 0.0
    %620 = vmatpush1.msra.mxu0 0.0
    %621 = vmatprep.subr.mxu0 0.0
    %622 = vmatpush1.msra.mxu0 0.0
    %623 = vmatprep.subr.mxu0 0.0
    %624 = vmatpush1.msra.mxu0 0.0
    %625 = vmatprep.subr.mxu0 0.0
    %626 = vmatpush1.msra.mxu0 0.0
    %627 = vmatprep.subr.mxu0 0.0
    %628 = vmatpush1.msra.mxu0 0.0
    %629 = vmatprep.subr.mxu0 0.0
    %630 = vmatpush1.msra.mxu0 0.0
    %631 = vmatprep.subr.mxu0 0.0
    %632 = vmatpush1.msra.mxu0 0.0
    %633 = vmatprep.subr.mxu0 0.0
    %634 = vmatpush1.msra.mxu0 0.0
    %635 = vmatprep.subr.mxu0 0.0
    %636 = vmatpush1.msra.mxu0 0.0
    %637 = vmatprep.subr.mxu0 0.0
    %638 = vmatpush1.msra.mxu0 0.0
    %639 = vmatprep.subr.mxu0 0.0
    %640 = vmatpush1.msra.mxu0 0.0
    %641 = vmatprep.subr.mxu0 0.0
    %642 = vmatpush1.msra.mxu0 0.0
    %643 = vmatprep.subr.mxu0 0.0
    %644 = vmatpush1.msra.mxu0 0.0
    %645 = vmatprep.subr.mxu0 0.0
    %646 = vmatpush1.msra.mxu0 %v589
    %647 = vmatprep.subr.mxu0 0.0
    %648 = vmatpush2.msra.mxu0 0.0
    %649 = vmatprep.subr.mxu0 0.0
    %650 = vmatpush2.msra.mxu0 0.0
    %651 = vmatprep.subr.mxu0 0.0
    %652 = vmatpush2.msra.mxu0 0.0
    %653 = vmatprep.subr.mxu0 0.0
    %654 = vmatpush2.msra.mxu0 0.0
    %655 = vmatprep.subr.mxu0 0.0
    %656 = vmatpush2.msra.mxu0 0.0
    %657 = vmatprep.subr.mxu0 0.0
    %658 = vmatpush2.msra.mxu0 0.0
    %659 = vmatprep.subr.mxu0 0.0
    %660 = vmatpush2.msra.mxu0 0.0
    %661 = vmatprep.subr.mxu0 0.0
    %662 = vmatpush2.msra.mxu0 0.0
    %663 = vmatprep.subr.mxu0 0.0
    %664 = vmatpush2.msra.mxu0 0.0
    %665 = vmatprep.subr.mxu0 0.0
    %666 = vmatpush2.msra.mxu0 0.0
    %667 = vmatprep.subr.mxu0 0.0
    %668 = vmatpush2.msra.mxu0 0.0
    %669 = vmatprep.subr.mxu0 0.0
    %670 = vmatpush2.msra.mxu0 0.0
    %671 = vmatprep.subr.mxu0 0.0
    %672 = vmatpush2.msra.mxu0 0.0
    %673 = vmatprep.subr.mxu0 0.0
    %674 = vmatpush2.msra.mxu0 0.0
    %675 = vmatprep.subr.mxu0 0.0
    %676 = vmatpush2.msra.mxu0 0.0
    %677 = vmatprep.subr.mxu0 0.0
    %678 = vmatpush2.msra.mxu0 0.0
    %679 = vmatprep.mubr.f32.mxu0 0.0
    %680 = vmatmul.mubr.f32.gmra.mxu0 %v592
    %v681 = vpop.f32.mrf.mxu0
    %v682 = vadd.f32 0.0, %v681
    %v683 = vpop.f32.mrf.mxu0
    %684 = vmatprep.mubr.f32.mxu0 0.0
    %685 = vmatmul.mubr.f32.gmra.mxu0 %v595
    %v686 = vpop.f32.mrf.mxu0
    %v687 = vadd.f32 0.0, %v686
    %v688 = vpop.f32.mrf.mxu0
    %689 = vmatprep.mubr.f32.mxu0 0.0
    %690 = vmatmul.mubr.f32.gmra.mxu0 %v598
    %v691 = vpop.f32.mrf.mxu0
    %v692 = vadd.f32 0.0, %v691
    %v693 = vpop.f32.mrf.mxu0
    %694 = vmatprep.mubr.f32.mxu0 0.0
    %695 = vmatmul.mubr.f32.gmra.mxu0 %v601
    %v696 = vpop.f32.mrf.mxu0
    %v697 = vadd.f32 0.0, %v696
    %v698 = vpop.f32.mrf.mxu0
    %699 = vmatprep.mubr.f32.mxu0 0.0
    %700 = vmatmul.mubr.f32.gmra.mxu0 %v604
    %v701 = vpop.f32.mrf.mxu0
    %v702 = vadd.f32 0.0, %v701
    %v703 = vpop.f32.mrf.mxu0
    %704 = vmatprep.mubr.f32.mxu0 0.0
    %705 = vmatmul.mubr.f32.gmra.mxu0 %v607
    %v706 = vpop.f32.mrf.mxu0
    %v707 = vadd.f32 0.0, %v706
    %v708 = vpop.f32.mrf.mxu0
    %709 = vmatprep.mubr.f32.mxu0 0.0
    %710 = vmatmul.mubr.f32.gmra.mxu0 %v610
    %v711 = vpop.f32.mrf.mxu0
    %v712 = vadd.f32 0.0, %v711
    %v713 = vpop.f32.mrf.mxu0
    %714 = vmatprep.mubr.f32.mxu0 0.0
    %715 = vmatmul.mubr.f32.gmra.mxu0 %v613
    %v716 = vpop.f32.mrf.mxu0
    %v717 = vadd.f32 0.0, %v716
    %v718 = vpop.f32.mrf.mxu0
    %719 = vdwg.mxu0
    %728 = vrot.lane.b32.xlu0 %v682, 1
    %v729 = vpop.permute.xlu0 %728
    %730 = vrot.lane.b32.xlu0 %v687, 1
    %v731 = vpop.permute.xlu0 %730
    %732 = vrot.lane.b32.xlu0 %v692, 1
    %v733 = vpop.permute.xlu0 %732
    %734 = vrot.lane.b32.xlu0 %v697, 1
    %v735 = vpop.permute.xlu0 %734
    %736 = vrot.lane.b32.xlu0 %v702, 1
    %v737 = vpop.permute.xlu0 %736
    %738 = vrot.lane.b32.xlu0 %v707, 1
    %v739 = vpop.permute.xlu0 %738
    %740 = vrot.lane.b32.xlu0 %v712, 1
    %v741 = vpop.permute.xlu0 %740
    %742 = vrot.lane.b32.xlu0 %v717, 1
    %v743 = vpop.permute.xlu0 %742
    %v752 = vsel %vm78, 0.0, %v729
    %v753 = vsel %vm78, 0.0, %v731
    %v754 = vsel %vm78, 0.0, %v733
    %v755 = vsel %vm78, 0.0, %v735
    %v756 = vsel %vm78, 0.0, %v737
    %v757 = vsel %vm78, 0.0, %v739
    %v758 = vsel %vm78, 0.0, %v741
    %v759 = vsel %vm78, 0.0, %v743
    %760 = vrot.lane.b32.xlu0 %v682, 127
    %v761 = vpop.permute.xlu0 %760
    %762 = vrot.lane.b32.xlu0 %v687, 127
    %v763 = vpop.permute.xlu0 %762
    %764 = vrot.lane.b32.xlu0 %v692, 127
    %v765 = vpop.permute.xlu0 %764
    %766 = vrot.lane.b32.xlu0 %v697, 127
    %v767 = vpop.permute.xlu0 %766
    %768 = vrot.lane.b32.xlu0 %v702, 127
    %v769 = vpop.permute.xlu0 %768
    %770 = vrot.lane.b32.xlu0 %v707, 127
    %v771 = vpop.permute.xlu0 %770
    %772 = vrot.lane.b32.xlu0 %v712, 127
    %v773 = vpop.permute.xlu0 %772
    %774 = vrot.lane.b32.xlu0 %v717, 127
    %v775 = vpop.permute.xlu0 %774
    %v784 = vsel %vm125, %v761, 0.0
    %v785 = vsel %vm125, %v763, 0.0
    %v786 = vsel %vm125, %v765, 0.0
    %v787 = vsel %vm125, %v767, 0.0
    %v788 = vsel %vm125, %v769, 0.0
    %v789 = vsel %vm125, %v771, 0.0
    %v790 = vsel %vm125, %v773, 0.0
    %v791 = vsel %vm125, %v775, 0.0
    %v792 = vld [vmem:[%s5] sm:$0xf]
    %v793 = vld [vmem:[%s5 + $0x4] sm:$0xf]
    %v794 = vld [vmem:[%s5 + $0x8] sm:$0xf]
    %v795 = vld [vmem:[%s5 + $0xc] sm:$0xf]
    %v796 = vld [vmem:[%s5 + $0x10] sm:$0xf]
    %v797 = vld [vmem:[%s5 + $0x14] sm:$0xf]
    %v798 = vld [vmem:[%s5 + $0x18] sm:$0xf]
    %v799 = vld [vmem:[%s5 + $0x1c] sm:$0xf]
    %v800 = vpack.c.bf16 %v753, %v752
    %v801 = vpack.c.bf16 %v755, %v754
    %v802 = vpack.c.bf16 %v687, %v682
    %v803 = vpack.c.bf16 %v697, %v692
    %v804 = vpack.c.bf16 %v785, %v784
    %v805 = vpack.c.bf16 %v787, %v786
    %v806 = vpack.c.bf16 %v757, %v756
    %v807 = vpack.c.bf16 %v759, %v758
    %v808 = vpack.c.bf16 %v707, %v702
    %v809 = vpack.c.bf16 %v717, %v712
    %v810 = vpack.c.bf16 %v789, %v788
    %v811 = vpack.c.bf16 %v791, %v790
    %v812 = vld [vmem:[%s6] sm:$0xff]
    %v813 = vld [vmem:[%s6 + $0x8] sm:$0xff]
    %v814 = vld [vmem:[%s6 + $0x10] sm:$0xff]
    %v815 = vld [vmem:[%s6 + $0x18] sm:$0xff]
    %v816 = vld [vmem:[%s6 + $0x20] sm:$0xff]
    %v817 = vld [vmem:[%s6 + $0x28] sm:$0xff]
    %v818 = vld [vmem:[%s6 + $0x30] sm:$0xff]
    %v819 = vld [vmem:[%s6 + $0x38] sm:$0xff]
    %821 = vset.pattern.permute.xlu0 0
    %822 = vperm.xlu0 %821, %v812
    %v823 = vpop.permute.xlu0 %822
    %826 = vset.pattern.permute.xlu0 0
    %827 = vperm.xlu0 %826, %v813
    %v828 = vpop.permute.xlu0 %827
    %831 = vset.pattern.permute.xlu0 0
    %832 = vperm.xlu0 %831, %v814
    %v833 = vpop.permute.xlu0 %832
    %836 = vset.pattern.permute.xlu0 0
    %837 = vperm.xlu0 %836, %v815
    %v838 = vpop.permute.xlu0 %837
    %841 = vset.pattern.permute.xlu0 0
    %842 = vperm.xlu0 %841, %v816
    %v843 = vpop.permute.xlu0 %842
    %846 = vset.pattern.permute.xlu0 0
    %847 = vperm.xlu0 %846, %v817
    %v848 = vpop.permute.xlu0 %847
    %851 = vset.pattern.permute.xlu0 0
    %852 = vperm.xlu0 %851, %v818
    %v853 = vpop.permute.xlu0 %852
    %856 = vset.pattern.permute.xlu0 0
    %857 = vperm.xlu0 %856, %v819
    %v858 = vpop.permute.xlu0 %857
    %v868 = vunpack.c.l.b16 %v792
    %v869 = vunpack.c.l.b16 %v793
    %v870 = vunpack.c.l.b16 %v794
    %v871 = vunpack.c.l.b16 %v795
    %v872 = vunpack.c.l.b16 %v796
    %v873 = vunpack.c.l.b16 %v797
    %v874 = vunpack.c.l.b16 %v798
    %v875 = vunpack.c.l.b16 %v799
    %v876 = vpack.c.b16 %v869, %v868
    %v877 = vpack.c.b16 %v871, %v870
    %v878 = vpack.c.b16 %v873, %v872
    %v879 = vpack.c.b16 %v875, %v874
    %vm880 = vcmask 785408
    %v882 = vsel %vm880, %v876, 0
    %v885 = vsel %vm880, %v877, 0
    %v888 = vsel %vm880, %v878, 0
    %v891 = vsel %vm880, %v879, 0
    %893 = vmatprep.subr.bf16.mxu0 0
    %894 = vmatpush1.bf16.msra.mxu0 0
    %895 = vmatprep.subr.bf16.mxu0 0
    %896 = vmatpush1.bf16.msra.mxu0 0
    %897 = vmatprep.subr.bf16.mxu0 0
    %898 = vmatpush1.bf16.msra.mxu0 %v805
    %899 = vmatprep.subr.bf16.mxu0 0
    %900 = vmatpush1.bf16.msra.mxu0 %v804
    %901 = vmatprep.subr.bf16.mxu0 0
    %902 = vmatpush1.bf16.msra.mxu0 %v803
    %903 = vmatprep.subr.bf16.mxu0 0
    %904 = vmatpush1.bf16.msra.mxu0 %v802
    %905 = vmatprep.subr.bf16.mxu0 0
    %906 = vmatpush1.bf16.msra.mxu0 %v801
    %907 = vmatprep.subr.bf16.mxu0 0
    %908 = vmatpush1.bf16.msra.mxu0 %v800
    %909 = vmatprep.subr.bf16.mxu0 0
    %910 = vmatpush2.bf16.msra.mxu0 0
    %911 = vmatprep.subr.bf16.mxu0 0
    %912 = vmatpush2.bf16.msra.mxu0 0
    %913 = vmatprep.subr.bf16.mxu0 0
    %914 = vmatpush2.bf16.msra.mxu0 0
    %915 = vmatprep.subr.bf16.mxu0 0
    %916 = vmatpush2.bf16.msra.mxu0 0
    %917 = vmatprep.subr.bf16.mxu0 0
    %918 = vmatpush2.bf16.msra.mxu0 0
    %919 = vmatprep.subr.bf16.mxu0 0
    %920 = vmatpush2.bf16.msra.mxu0 0
    %921 = vmatprep.subr.bf16.mxu0 0
    %922 = vmatpush2.bf16.msra.mxu0 0
    %923 = vmatprep.subr.bf16.mxu0 0
    %924 = vmatpush2.bf16.msra.mxu0 0
    %925 = vmatprep.mubr.bf16.mxu0 0
    %926 = vmatmul.mubr.bf16.gmra.mxu0 %v882
    %v927 = vpop.f32.mrf.mxu0
    %v928 = vadd.f32 %v823, %v927
    %v929 = vpop.f32.mrf.mxu0
    %v930 = vpop.f32.mrf.mxu0
    %v931 = vadd.f32 %v828, %v930
    %v932 = vpop.f32.mrf.mxu0
    %933 = vmatprep.mubr.bf16.mxu0 0
    %934 = vmatmul.mubr.bf16.gmra.mxu0 %v885
    %v935 = vpop.f32.mrf.mxu0
    %v936 = vadd.f32 %v833, %v935
    %v937 = vpop.f32.mrf.mxu0
    %v938 = vpop.f32.mrf.mxu0
    %v939 = vadd.f32 %v838, %v938
    %v940 = vpop.f32.mrf.mxu0
    %941 = vmatprep.mubr.bf16.mxu0 0
    %942 = vmatmul.mubr.bf16.gmra.mxu0 %v888
    %v943 = vpop.f32.mrf.mxu0
    %v944 = vadd.f32 %v843, %v943
    %v945 = vpop.f32.mrf.mxu0
    %v946 = vpop.f32.mrf.mxu0
    %v947 = vadd.f32 %v848, %v946
    %v948 = vpop.f32.mrf.mxu0
    %949 = vmatprep.mubr.bf16.mxu0 0
    %950 = vmatmul.mubr.bf16.gmra.mxu0 %v891
    %v951 = vpop.f32.mrf.mxu0
    %v952 = vadd.f32 %v853, %v951
    %v953 = vpop.f32.mrf.mxu0
    %v954 = vpop.f32.mrf.mxu0
    %v955 = vadd.f32 %v858, %v954
    %v956 = vpop.f32.mrf.mxu0
    %957 = vdwg.mxu0
    %958 = vmatprep.subr.bf16.mxu0 0
    %959 = vmatpush1.bf16.msra.mxu0 0
    %960 = vmatprep.subr.bf16.mxu0 0
    %961 = vmatpush1.bf16.msra.mxu0 0
    %962 = vmatprep.subr.bf16.mxu0 0
    %963 = vmatpush1.bf16.msra.mxu0 %v811
    %964 = vmatprep.subr.bf16.mxu0 0
    %965 = vmatpush1.bf16.msra.mxu0 %v810
    %966 = vmatprep.subr.bf16.mxu0 0
    %967 = vmatpush1.bf16.msra.mxu0 %v809
    %968 = vmatprep.subr.bf16.mxu0 0
    %969 = vmatpush1.bf16.msra.mxu0 %v808
    %970 = vmatprep.subr.bf16.mxu0 0
    %971 = vmatpush1.bf16.msra.mxu0 %v807
    %972 = vmatprep.subr.bf16.mxu0 0
    %973 = vmatpush1.bf16.msra.mxu0 %v806
    %974 = vmatprep.subr.bf16.mxu0 0
    %975 = vmatpush2.bf16.msra.mxu0 0
    %976 = vmatprep.subr.bf16.mxu0 0
    %977 = vmatpush2.bf16.msra.mxu0 0
    %978 = vmatprep.subr.bf16.mxu0 0
    %979 = vmatpush2.bf16.msra.mxu0 0
    %980 = vmatprep.subr.bf16.mxu0 0
    %981 = vmatpush2.bf16.msra.mxu0 0
    %982 = vmatprep.subr.bf16.mxu0 0
    %983 = vmatpush2.bf16.msra.mxu0 0
    %984 = vmatprep.subr.bf16.mxu0 0
    %985 = vmatpush2.bf16.msra.mxu0 0
    %986 = vmatprep.subr.bf16.mxu0 0
    %987 = vmatpush2.bf16.msra.mxu0 0
    %988 = vmatprep.subr.bf16.mxu0 0
    %989 = vmatpush2.bf16.msra.mxu0 0
    %990 = vmatprep.mubr.bf16.mxu0 0
    %991 = vmatmul.mubr.bf16.gmra.mxu0 %v882
    %v992 = vpop.f32.mrf.mxu0
    %v993 = vadd.f32 %v823, %v992
    %v994 = vpop.f32.mrf.mxu0
    %v995 = vpop.f32.mrf.mxu0
    %v996 = vadd.f32 %v828, %v995
    %v997 = vpop.f32.mrf.mxu0
    %998 = vmatprep.mubr.bf16.mxu0 0
    %999 = vmatmul.mubr.bf16.gmra.mxu0 %v885
    %v1000 = vpop.f32.mrf.mxu0
    %v1001 = vadd.f32 %v833, %v1000
    %v1002 = vpop.f32.mrf.mxu0
    %v1003 = vpop.f32.mrf.mxu0
    %v1004 = vadd.f32 %v838, %v1003
    %v1005 = vpop.f32.mrf.mxu0
    %1006 = vmatprep.mubr.bf16.mxu0 0
    %1007 = vmatmul.mubr.bf16.gmra.mxu0 %v888
    %v1008 = vpop.f32.mrf.mxu0
    %v1009 = vadd.f32 %v843, %v1008
    %v1010 = vpop.f32.mrf.mxu0
    %v1011 = vpop.f32.mrf.mxu0
    %v1012 = vadd.f32 %v848, %v1011
    %v1013 = vpop.f32.mrf.mxu0
    %1014 = vmatprep.mubr.bf16.mxu0 0
    %1015 = vmatmul.mubr.bf16.gmra.mxu0 %v891
    %v1016 = vpop.f32.mrf.mxu0
    %v1017 = vadd.f32 %v853, %v1016
    %v1018 = vpop.f32.mrf.mxu0
    %v1019 = vpop.f32.mrf.mxu0
    %v1020 = vadd.f32 %v858, %v1019
    %v1021 = vpop.f32.mrf.mxu0
    %1022 = vdwg.mxu0
    %v1023 = vmax.f32 %v928, 0.0
    %v1024 = vmax.f32 %v931, 0.0
    %v1025 = vmax.f32 %v936, 0.0
    %v1026 = vmax.f32 %v939, 0.0
    %v1027 = vmax.f32 %v944, 0.0
    %v1028 = vmax.f32 %v947, 0.0
    %v1029 = vmax.f32 %v952, 0.0
    %v1030 = vmax.f32 %v955, 0.0
    %v1031 = vmax.f32 %v993, 0.0
    %v1032 = vmax.f32 %v996, 0.0
    %v1033 = vmax.f32 %v1001, 0.0
    %v1034 = vmax.f32 %v1004, 0.0
    %v1035 = vmax.f32 %v1009, 0.0
    %v1036 = vmax.f32 %v1012, 0.0
    %v1037 = vmax.f32 %v1017, 0.0
    %v1038 = vmax.f32 %v1020, 0.0
    %v1039 = vld [vmem:[%s15] sm:$0xf]
    %vm1040 = vcmask 31744
    %v1042 = vsel %vm1040, %v1023, 0
    %v1045 = vsel %vm1040, %v1024, 0
    %v1048 = vsel %vm1040, %v1025, 0
    %v1051 = vsel %vm1040, %v1026, 0
    %v1054 = vsel %vm1040, %v1027, 0
    %v1057 = vsel %vm1040, %v1028, 0
    %v1060 = vsel %vm1040, %v1029, 0
    %v1063 = vsel %vm1040, %v1030, 0
    %v1066 = vsel %vm1040, %v1031, 0
    %v1069 = vsel %vm1040, %v1032, 0
    %v1072 = vsel %vm1040, %v1033, 0
    %v1075 = vsel %vm1040, %v1034, 0
    %v1078 = vsel %vm1040, %v1035, 0
    %v1081 = vsel %vm1040, %v1036, 0
    %v1084 = vsel %vm1040, %v1037, 0
    %v1087 = vsel %vm1040, %v1038, 0
    %vm1089 = vcmask 1043456
    %v1091 = vsel %vm1089, %v1039, 0
    %1093 = vmatprep.subr.mxu0 0.0
    %1094 = vmatpush1.msra.mxu0 0.0
    %1095 = vmatprep.subr.mxu0 0.0
    %1096 = vmatpush1.msra.mxu0 0.0
    %1097 = vmatprep.subr.mxu0 0.0
    %1098 = vmatpush1.msra.mxu0 0.0
    %1099 = vmatprep.subr.mxu0 0.0
    %1100 = vmatpush1.msra.mxu0 0.0
    %1101 = vmatprep.subr.mxu0 0.0
    %1102 = vmatpush1.msra.mxu0 0.0
    %1103 = vmatprep.subr.mxu0 0.0
    %1104 = vmatpush1.msra.mxu0 0.0
    %1105 = vmatprep.subr.mxu0 0.0
    %1106 = vmatpush1.msra.mxu0 0.0
    %1107 = vmatprep.subr.mxu0 0.0
    %1108 = vmatpush1.msra.mxu0 0.0
    %1109 = vmatprep.subr.mxu0 0.0
    %1110 = vmatpush1.msra.mxu0 0.0
    %1111 = vmatprep.subr.mxu0 0.0
    %1112 = vmatpush1.msra.mxu0 0.0
    %1113 = vmatprep.subr.mxu0 0.0
    %1114 = vmatpush1.msra.mxu0 0.0
    %1115 = vmatprep.subr.mxu0 0.0
    %1116 = vmatpush1.msra.mxu0 0.0
    %1117 = vmatprep.subr.mxu0 0.0
    %1118 = vmatpush1.msra.mxu0 0.0
    %1119 = vmatprep.subr.mxu0 0.0
    %1120 = vmatpush1.msra.mxu0 0.0
    %1121 = vmatprep.subr.mxu0 0.0
    %1122 = vmatpush1.msra.mxu0 0.0
    %1123 = vmatprep.subr.mxu0 0.0
    %1124 = vmatpush1.msra.mxu0 %v1091
    %1125 = vmatprep.subr.mxu0 0.0
    %1126 = vmatpush2.msra.mxu0 0.0
    %1127 = vmatprep.subr.mxu0 0.0
    %1128 = vmatpush2.msra.mxu0 0.0
    %1129 = vmatprep.subr.mxu0 0.0
    %1130 = vmatpush2.msra.mxu0 0.0
    %1131 = vmatprep.subr.mxu0 0.0
    %1132 = vmatpush2.msra.mxu0 0.0
    %1133 = vmatprep.subr.mxu0 0.0
    %1134 = vmatpush2.msra.mxu0 0.0
    %1135 = vmatprep.subr.mxu0 0.0
    %1136 = vmatpush2.msra.mxu0 0.0
    %1137 = vmatprep.subr.mxu0 0.0
    %1138 = vmatpush2.msra.mxu0 0.0
    %1139 = vmatprep.subr.mxu0 0.0
    %1140 = vmatpush2.msra.mxu0 0.0
    %1141 = vmatprep.subr.mxu0 0.0
    %1142 = vmatpush2.msra.mxu0 0.0
    %1143 = vmatprep.subr.mxu0 0.0
    %1144 = vmatpush2.msra.mxu0 0.0
    %1145 = vmatprep.subr.mxu0 0.0
    %1146 = vmatpush2.msra.mxu0 0.0
    %1147 = vmatprep.subr.mxu0 0.0
    %1148 = vmatpush2.msra.mxu0 0.0
    %1149 = vmatprep.subr.mxu0 0.0
    %1150 = vmatpush2.msra.mxu0 0.0
    %1151 = vmatprep.subr.mxu0 0.0
    %1152 = vmatpush2.msra.mxu0 0.0
    %1153 = vmatprep.subr.mxu0 0.0
    %1154 = vmatpush2.msra.mxu0 0.0
    %1155 = vmatprep.subr.mxu0 0.0
    %1156 = vmatpush2.msra.mxu0 0.0
    %1157 = vmatprep.mubr.f32.mxu0 0.0
    %1158 = vmatmul.mubr.f32.gmra.mxu0 %v1042
    %v1159 = vpop.f32.mrf.mxu0
    %v1160 = vadd.f32 0.0, %v1159
    %v1161 = vpop.f32.mrf.mxu0
    %1162 = vmatprep.mubr.f32.mxu0 0.0
    %1163 = vmatmul.mubr.f32.gmra.mxu0 %v1045
    %v1164 = vpop.f32.mrf.mxu0
    %v1165 = vadd.f32 0.0, %v1164
    %v1166 = vpop.f32.mrf.mxu0
    %1167 = vmatprep.mubr.f32.mxu0 0.0
    %1168 = vmatmul.mubr.f32.gmra.mxu0 %v1048
    %v1169 = vpop.f32.mrf.mxu0
    %v1170 = vadd.f32 0.0, %v1169
    %v1171 = vpop.f32.mrf.mxu0
    %1172 = vmatprep.mubr.f32.mxu0 0.0
    %1173 = vmatmul.mubr.f32.gmra.mxu0 %v1051
    %v1174 = vpop.f32.mrf.mxu0
    %v1175 = vadd.f32 0.0, %v1174
    %v1176 = vpop.f32.mrf.mxu0
    %1177 = vmatprep.mubr.f32.mxu0 0.0
    %1178 = vmatmul.mubr.f32.gmra.mxu0 %v1054
    %v1179 = vpop.f32.mrf.mxu0
    %v1180 = vadd.f32 0.0, %v1179
    %v1181 = vpop.f32.mrf.mxu0
    %1182 = vmatprep.mubr.f32.mxu0 0.0
    %1183 = vmatmul.mubr.f32.gmra.mxu0 %v1057
    %v1184 = vpop.f32.mrf.mxu0
    %v1185 = vadd.f32 0.0, %v1184
    %v1186 = vpop.f32.mrf.mxu0
    %1187 = vmatprep.mubr.f32.mxu0 0.0
    %1188 = vmatmul.mubr.f32.gmra.mxu0 %v1060
    %v1189 = vpop.f32.mrf.mxu0
    %v1190 = vadd.f32 0.0, %v1189
    %v1191 = vpop.f32.mrf.mxu0
    %1192 = vmatprep.mubr.f32.mxu0 0.0
    %1193 = vmatmul.mubr.f32.gmra.mxu0 %v1063
    %v1194 = vpop.f32.mrf.mxu0
    %v1195 = vadd.f32 0.0, %v1194
    %v1196 = vpop.f32.mrf.mxu0
    %1197 = vmatprep.mubr.f32.mxu0 0.0
    %1198 = vmatmul.mubr.f32.gmra.mxu0 %v1066
    %v1199 = vpop.f32.mrf.mxu0
    %v1200 = vadd.f32 0.0, %v1199
    %v1201 = vpop.f32.mrf.mxu0
    %1202 = vmatprep.mubr.f32.mxu0 0.0
    %1203 = vmatmul.mubr.f32.gmra.mxu0 %v1069
    %v1204 = vpop.f32.mrf.mxu0
    %v1205 = vadd.f32 0.0, %v1204
    %v1206 = vpop.f32.mrf.mxu0
    %1207 = vmatprep.mubr.f32.mxu0 0.0
    %1208 = vmatmul.mubr.f32.gmra.mxu0 %v1072
    %v1209 = vpop.f32.mrf.mxu0
    %v1210 = vadd.f32 0.0, %v1209
    %v1211 = vpop.f32.mrf.mxu0
    %1212 = vmatprep.mubr.f32.mxu0 0.0
    %1213 = vmatmul.mubr.f32.gmra.mxu0 %v1075
    %v1214 = vpop.f32.mrf.mxu0
    %v1215 = vadd.f32 0.0, %v1214
    %v1216 = vpop.f32.mrf.mxu0
    %1217 = vmatprep.mubr.f32.mxu0 0.0
    %1218 = vmatmul.mubr.f32.gmra.mxu0 %v1078
    %v1219 = vpop.f32.mrf.mxu0
    %v1220 = vadd.f32 0.0, %v1219
    %v1221 = vpop.f32.mrf.mxu0
    %1222 = vmatprep.mubr.f32.mxu0 0.0
    %1223 = vmatmul.mubr.f32.gmra.mxu0 %v1081
    %v1224 = vpop.f32.mrf.mxu0
    %v1225 = vadd.f32 0.0, %v1224
    %v1226 = vpop.f32.mrf.mxu0
    %1227 = vmatprep.mubr.f32.mxu0 0.0
    %1228 = vmatmul.mubr.f32.gmra.mxu0 %v1084
    %v1229 = vpop.f32.mrf.mxu0
    %v1230 = vadd.f32 0.0, %v1229
    %v1231 = vpop.f32.mrf.mxu0
    %1232 = vmatprep.mubr.f32.mxu0 0.0
    %1233 = vmatmul.mubr.f32.gmra.mxu0 %v1087
    %v1234 = vpop.f32.mrf.mxu0
    %v1235 = vadd.f32 0.0, %v1234
    %v1236 = vpop.f32.mrf.mxu0
    %1237 = vdwg.mxu0
    %1254 = vrot.lane.b32.xlu0 %v1160, 1
    %v1255 = vpop.permute.xlu0 %1254
    %1256 = vrot.lane.b32.xlu0 %v1165, 1
    %v1257 = vpop.permute.xlu0 %1256
    %1258 = vrot.lane.b32.xlu0 %v1170, 1
    %v1259 = vpop.permute.xlu0 %1258
    %1260 = vrot.lane.b32.xlu0 %v1175, 1
    %v1261 = vpop.permute.xlu0 %1260
    %1262 = vrot.lane.b32.xlu0 %v1180, 1
    %v1263 = vpop.permute.xlu0 %1262
    %1264 = vrot.lane.b32.xlu0 %v1185, 1
    %v1265 = vpop.permute.xlu0 %1264
    %1266 = vrot.lane.b32.xlu0 %v1190, 1
    %v1267 = vpop.permute.xlu0 %1266
    %1268 = vrot.lane.b32.xlu0 %v1195, 1
    %v1269 = vpop.permute.xlu0 %1268
    %1270 = vrot.lane.b32.xlu0 %v1200, 1
    %v1271 = vpop.permute.xlu0 %1270
    %1272 = vrot.lane.b32.xlu0 %v1205, 1
    %v1273 = vpop.permute.xlu0 %1272
    %1274 = vrot.lane.b32.xlu0 %v1210, 1
    %v1275 = vpop.permute.xlu0 %1274
    %1276 = vrot.lane.b32.xlu0 %v1215, 1
    %v1277 = vpop.permute.xlu0 %1276
    %1278 = vrot.lane.b32.xlu0 %v1220, 1
    %v1279 = vpop.permute.xlu0 %1278
    %1280 = vrot.lane.b32.xlu0 %v1225, 1
    %v1281 = vpop.permute.xlu0 %1280
    %1282 = vrot.lane.b32.xlu0 %v1230, 1
    %v1283 = vpop.permute.xlu0 %1282
    %1284 = vrot.lane.b32.xlu0 %v1235, 1
    %v1285 = vpop.permute.xlu0 %1284
    %v1302 = vsel %vm78, 0.0, %v1255
    %v1303 = vsel %vm78, 0.0, %v1257
    %v1304 = vsel %vm78, 0.0, %v1259
    %v1305 = vsel %vm78, 0.0, %v1261
    %v1306 = vsel %vm78, 0.0, %v1263
    %v1307 = vsel %vm78, 0.0, %v1265
    %v1308 = vsel %vm78, 0.0, %v1267
    %v1309 = vsel %vm78, 0.0, %v1269
    %v1310 = vsel %vm78, 0.0, %v1271
    %v1311 = vsel %vm78, 0.0, %v1273
    %v1312 = vsel %vm78, 0.0, %v1275
    %v1313 = vsel %vm78, 0.0, %v1277
    %v1314 = vsel %vm78, 0.0, %v1279
    %v1315 = vsel %vm78, 0.0, %v1281
    %v1316 = vsel %vm78, 0.0, %v1283
    %v1317 = vsel %vm78, 0.0, %v1285
    %1318 = vrot.lane.b32.xlu0 %v1160, 127
    %v1319 = vpop.permute.xlu0 %1318
    %1320 = vrot.lane.b32.xlu0 %v1165, 127
    %v1321 = vpop.permute.xlu0 %1320
    %1322 = vrot.lane.b32.xlu0 %v1170, 127
    %v1323 = vpop.permute.xlu0 %1322
    %1324 = vrot.lane.b32.xlu0 %v1175, 127
    %v1325 = vpop.permute.xlu0 %1324
    %1326 = vrot.lane.b32.xlu0 %v1180, 127
    %v1327 = vpop.permute.xlu0 %1326
    %1328 = vrot.lane.b32.xlu0 %v1185, 127
    %v1329 = vpop.permute.xlu0 %1328
    %1330 = vrot.lane.b32.xlu0 %v1190, 127
    %v1331 = vpop.permute.xlu0 %1330
    %1332 = vrot.lane.b32.xlu0 %v1195, 127
    %v1333 = vpop.permute.xlu0 %1332
    %1334 = vrot.lane.b32.xlu0 %v1200, 127
    %v1335 = vpop.permute.xlu0 %1334
    %1336 = vrot.lane.b32.xlu0 %v1205, 127
    %v1337 = vpop.permute.xlu0 %1336
    %1338 = vrot.lane.b32.xlu0 %v1210, 127
    %v1339 = vpop.permute.xlu0 %1338
    %1340 = vrot.lane.b32.xlu0 %v1215, 127
    %v1341 = vpop.permute.xlu0 %1340
    %1342 = vrot.lane.b32.xlu0 %v1220, 127
    %v1343 = vpop.permute.xlu0 %1342
    %1344 = vrot.lane.b32.xlu0 %v1225, 127
    %v1345 = vpop.permute.xlu0 %1344
    %1346 = vrot.lane.b32.xlu0 %v1230, 127
    %v1347 = vpop.permute.xlu0 %1346
    %1348 = vrot.lane.b32.xlu0 %v1235, 127
    %v1349 = vpop.permute.xlu0 %1348
    %v1366 = vsel %vm379, %v1319, 0.0
    %v1367 = vsel %vm379, %v1321, 0.0
    %v1368 = vsel %vm379, %v1323, 0.0
    %v1369 = vsel %vm379, %v1325, 0.0
    %v1370 = vsel %vm379, %v1327, 0.0
    %v1371 = vsel %vm379, %v1329, 0.0
    %v1372 = vsel %vm379, %v1331, 0.0
    %v1373 = vsel %vm379, %v1333, 0.0
    %v1374 = vsel %vm379, %v1335, 0.0
    %v1375 = vsel %vm379, %v1337, 0.0
    %v1376 = vsel %vm379, %v1339, 0.0
    %v1377 = vsel %vm379, %v1341, 0.0
    %v1378 = vsel %vm379, %v1343, 0.0
    %v1379 = vsel %vm379, %v1345, 0.0
    %v1380 = vsel %vm379, %v1347, 0.0
    %v1381 = vsel %vm379, %v1349, 0.0
    %v1382 = vld [vmem:[%s7] sm:$0xff]
    %v1383 = vld [vmem:[%s7 + $0x8] sm:$0xff]
    %v1384 = vld [vmem:[%s7 + $0x10] sm:$0xff]
    %v1385 = vld [vmem:[%s7 + $0x18] sm:$0xff]
    %v1386 = vpack.c.bf16 %v1303, %v1302
    %v1387 = vpack.c.bf16 %v1305, %v1304
    %v1388 = vpack.c.bf16 %v1307, %v1306
    %v1389 = vpack.c.bf16 %v1309, %v1308
    %v1390 = vpack.c.bf16 %v1165, %v1160
    %v1391 = vpack.c.bf16 %v1175, %v1170
    %v1392 = vpack.c.bf16 %v1185, %v1180
    %v1393 = vpack.c.bf16 %v1195, %v1190
    %v1394 = vpack.c.bf16 %v1367, %v1366
    %v1395 = vpack.c.bf16 %v1369, %v1368
    %v1396 = vpack.c.bf16 %v1371, %v1370
    %v1397 = vpack.c.bf16 %v1373, %v1372
    %v1398 = vpack.c.bf16 %v1311, %v1310
    %v1399 = vpack.c.bf16 %v1313, %v1312
    %v1400 = vpack.c.bf16 %v1315, %v1314
    %v1401 = vpack.c.bf16 %v1317, %v1316
    %v1402 = vpack.c.bf16 %v1205, %v1200
    %v1403 = vpack.c.bf16 %v1215, %v1210
    %v1404 = vpack.c.bf16 %v1225, %v1220
    %v1405 = vpack.c.bf16 %v1235, %v1230
    %v1406 = vpack.c.bf16 %v1375, %v1374
    %v1407 = vpack.c.bf16 %v1377, %v1376
    %v1408 = vpack.c.bf16 %v1379, %v1378
    %v1409 = vpack.c.bf16 %v1381, %v1380
    %v1410 = vld [vmem:[%s8] sm:$0xff]
    %v1411 = vld [vmem:[%s8 + $0x8] sm:$0xff]
    %v1412 = vld [vmem:[%s8 + $0x10] sm:$0xff]
    %v1413 = vld [vmem:[%s8 + $0x18] sm:$0xff]
    %1415 = vset.pattern.permute.xlu0 0
    %1416 = vperm.xlu0 %1415, %v1410
    %v1417 = vpop.permute.xlu0 %1416
    %1420 = vset.pattern.permute.xlu0 0
    %1421 = vperm.xlu0 %1420, %v1411
    %v1422 = vpop.permute.xlu0 %1421
    %1425 = vset.pattern.permute.xlu0 0
    %1426 = vperm.xlu0 %1425, %v1412
    %v1427 = vpop.permute.xlu0 %1426
    %1430 = vset.pattern.permute.xlu0 0
    %1431 = vperm.xlu0 %1430, %v1413
    %v1432 = vpop.permute.xlu0 %1431
    %v1438 = vunpack.c.l.b16 %v1382
    %v1439 = vunpack.c.h.b16 %v1382
    %v1440 = vunpack.c.l.b16 %v1383
    %v1441 = vunpack.c.h.b16 %v1383
    %v1442 = vunpack.c.l.b16 %v1384
    %v1443 = vunpack.c.h.b16 %v1384
    %v1444 = vunpack.c.l.b16 %v1385
    %v1445 = vunpack.c.h.b16 %v1385
    %v1446 = vpack.c.b16 %v1440, %v1438
    %v1447 = vpack.c.b16 %v1441, %v1439
    %v1448 = vpack.c.b16 %v1444, %v1442
    %v1449 = vpack.c.b16 %v1445, %v1443
    %vm1452 = vcmask 523264
    %v1454 = vsel %vm1452, %v1447, 0
    %v1457 = vsel %vm1452, %v1449, 0
    %1459 = vmatprep.subr.bf16.mxu0 0
    %1460 = vmatpush1.bf16.msra.mxu0 %v1393
    %1461 = vmatprep.subr.bf16.mxu0 0
    %1462 = vmatpush1.bf16.msra.mxu0 %v1392
    %1463 = vmatprep.subr.bf16.mxu0 0
    %1464 = vmatpush1.bf16.msra.mxu0 %v1391
    %1465 = vmatprep.subr.bf16.mxu0 0
    %1466 = vmatpush1.bf16.msra.mxu0 %v1390
    %1467 = vmatprep.subr.bf16.mxu0 0
    %1468 = vmatpush1.bf16.msra.mxu0 %v1389
    %1469 = vmatprep.subr.bf16.mxu0 0
    %1470 = vmatpush1.bf16.msra.mxu0 %v1388
    %1471 = vmatprep.subr.bf16.mxu0 0
    %1472 = vmatpush1.bf16.msra.mxu0 %v1387
    %1473 = vmatprep.subr.bf16.mxu0 0
    %1474 = vmatpush1.bf16.msra.mxu0 %v1386
    %1475 = vmatprep.subr.bf16.mxu0 0
    %1476 = vmatpush2.bf16.msra.mxu0 0
    %1477 = vmatprep.subr.bf16.mxu0 0
    %1478 = vmatpush2.bf16.msra.mxu0 0
    %1479 = vmatprep.subr.bf16.mxu0 0
    %1480 = vmatpush2.bf16.msra.mxu0 0
    %1481 = vmatprep.subr.bf16.mxu0 0
    %1482 = vmatpush2.bf16.msra.mxu0 0
    %1483 = vmatprep.subr.bf16.mxu0 0
    %1484 = vmatpush2.bf16.msra.mxu0 %v1397
    %1485 = vmatprep.subr.bf16.mxu0 0
    %1486 = vmatpush2.bf16.msra.mxu0 %v1396
    %1487 = vmatprep.subr.bf16.mxu0 0
    %1488 = vmatpush2.bf16.msra.mxu0 %v1395
    %1489 = vmatprep.subr.bf16.mxu0 0
    %1490 = vmatpush2.bf16.msra.mxu0 %v1394
    %1491 = vmatprep.mubr.bf16.mxu0 %v1454
    %1492 = vmatmul.mubr.bf16.gmra.mxu0 %v1446
    %v1493 = vpop.f32.mrf.mxu0
    %v1494 = vadd.f32 %v1417, %v1493
    %v1495 = vpop.f32.mrf.mxu0
    %v1496 = vpop.f32.mrf.mxu0
    %v1497 = vadd.f32 %v1422, %v1496
    %v1498 = vpop.f32.mrf.mxu0
    %1499 = vmatprep.mubr.bf16.mxu0 %v1457
    %1500 = vmatmul.mubr.bf16.gmra.mxu0 %v1448
    %v1501 = vpop.f32.mrf.mxu0
    %v1502 = vadd.f32 %v1427, %v1501
    %v1503 = vpop.f32.mrf.mxu0
    %v1504 = vpop.f32.mrf.mxu0
    %v1505 = vadd.f32 %v1432, %v1504
    %v1506 = vpop.f32.mrf.mxu0
    %1507 = vdwg.mxu0
    %1508 = vmatprep.subr.bf16.mxu0 0
    %1509 = vmatpush1.bf16.msra.mxu0 %v1405
    %1510 = vmatprep.subr.bf16.mxu0 0
    %1511 = vmatpush1.bf16.msra.mxu0 %v1404
    %1512 = vmatprep.subr.bf16.mxu0 0
    %1513 = vmatpush1.bf16.msra.mxu0 %v1403
    %1514 = vmatprep.subr.bf16.mxu0 0
    %1515 = vmatpush1.bf16.msra.mxu0 %v1402
    %1516 = vmatprep.subr.bf16.mxu0 0
    %1517 = vmatpush1.bf16.msra.mxu0 %v1401
    %1518 = vmatprep.subr.bf16.mxu0 0
    %1519 = vmatpush1.bf16.msra.mxu0 %v1400
    %1520 = vmatprep.subr.bf16.mxu0 0
    %1521 = vmatpush1.bf16.msra.mxu0 %v1399
    %1522 = vmatprep.subr.bf16.mxu0 0
    %1523 = vmatpush1.bf16.msra.mxu0 %v1398
    %1524 = vmatprep.subr.bf16.mxu0 0
    %1525 = vmatpush2.bf16.msra.mxu0 0
    %1526 = vmatprep.subr.bf16.mxu0 0
    %1527 = vmatpush2.bf16.msra.mxu0 0
    %1528 = vmatprep.subr.bf16.mxu0 0
    %1529 = vmatpush2.bf16.msra.mxu0 0
    %1530 = vmatprep.subr.bf16.mxu0 0
    %1531 = vmatpush2.bf16.msra.mxu0 0
    %1532 = vmatprep.subr.bf16.mxu0 0
    %1533 = vmatpush2.bf16.msra.mxu0 %v1409
    %1534 = vmatprep.subr.bf16.mxu0 0
    %1535 = vmatpush2.bf16.msra.mxu0 %v1408
    %1536 = vmatprep.subr.bf16.mxu0 0
    %1537 = vmatpush2.bf16.msra.mxu0 %v1407
    %1538 = vmatprep.subr.bf16.mxu0 0
    %1539 = vmatpush2.bf16.msra.mxu0 %v1406
    %1540 = vmatprep.mubr.bf16.mxu0 %v1454
    %1541 = vmatmul.mubr.bf16.gmra.mxu0 %v1446
    %v1542 = vpop.f32.mrf.mxu0
    %v1543 = vadd.f32 %v1417, %v1542
    %v1544 = vpop.f32.mrf.mxu0
    %v1545 = vpop.f32.mrf.mxu0
    %v1546 = vadd.f32 %v1422, %v1545
    %v1547 = vpop.f32.mrf.mxu0
    %1548 = vmatprep.mubr.bf16.mxu0 %v1457
    %1549 = vmatmul.mubr.bf16.gmra.mxu0 %v1448
    %v1550 = vpop.f32.mrf.mxu0
    %v1551 = vadd.f32 %v1427, %v1550
    %v1552 = vpop.f32.mrf.mxu0
    %v1553 = vpop.f32.mrf.mxu0
    %v1554 = vadd.f32 %v1432, %v1553
    %v1555 = vpop.f32.mrf.mxu0
    %1556 = vdwg.mxu0
    %v1557 = vmax.f32 %v1494, 0.0
    %v1558 = vmax.f32 %v1497, 0.0
    %v1559 = vmax.f32 %v1502, 0.0
    %v1560 = vmax.f32 %v1505, 0.0
    %v1561 = vmax.f32 %v1543, 0.0
    %v1562 = vmax.f32 %v1546, 0.0
    %v1563 = vmax.f32 %v1551, 0.0
    %v1564 = vmax.f32 %v1554, 0.0
    %v1565 = vld [vmem:[%s16] sm:$0xff]
    %v1567 = vsel %vm590, %v1557, 0
    %v1570 = vsel %vm590, %v1558, 0
    %v1573 = vsel %vm590, %v1559, 0
    %v1576 = vsel %vm590, %v1560, 0
    %v1579 = vsel %vm590, %v1561, 0
    %v1582 = vsel %vm590, %v1562, 0
    %v1585 = vsel %vm590, %v1563, 0
    %v1588 = vsel %vm590, %v1564, 0
    %1590 = vmatprep.subr.mxu0 0.0
    %1591 = vmatpush1.msra.mxu0 0.0
    %1592 = vmatprep.subr.mxu0 0.0
    %1593 = vmatpush1.msra.mxu0 0.0
    %1594 = vmatprep.subr.mxu0 0.0
    %1595 = vmatpush1.msra.mxu0 0.0
    %1596 = vmatprep.subr.mxu0 0.0
    %1597 = vmatpush1.msra.mxu0 0.0
    %1598 = vmatprep.subr.mxu0 0.0
    %1599 = vmatpush1.msra.mxu0 0.0
    %1600 = vmatprep.subr.mxu0 0.0
    %1601 = vmatpush1.msra.mxu0 0.0
    %1602 = vmatprep.subr.mxu0 0.0
    %1603 = vmatpush1.msra.mxu0 0.0
    %1604 = vmatprep.subr.mxu0 0.0
    %1605 = vmatpush1.msra.mxu0 0.0
    %1606 = vmatprep.subr.mxu0 0.0
    %1607 = vmatpush1.msra.mxu0 0.0
    %1608 = vmatprep.subr.mxu0 0.0
    %1609 = vmatpush1.msra.mxu0 0.0
    %1610 = vmatprep.subr.mxu0 0.0
    %1611 = vmatpush1.msra.mxu0 0.0
    %1612 = vmatprep.subr.mxu0 0.0
    %1613 = vmatpush1.msra.mxu0 0.0
    %1614 = vmatprep.subr.mxu0 0.0
    %1615 = vmatpush1.msra.mxu0 0.0
    %1616 = vmatprep.subr.mxu0 0.0
    %1617 = vmatpush1.msra.mxu0 0.0
    %1618 = vmatprep.subr.mxu0 0.0
    %1619 = vmatpush1.msra.mxu0 0.0
    %1620 = vmatprep.subr.mxu0 0.0
    %1621 = vmatpush1.msra.mxu0 %v1565
    %1622 = vmatprep.subr.mxu0 0.0
    %1623 = vmatpush2.msra.mxu0 0.0
    %1624 = vmatprep.subr.mxu0 0.0
    %1625 = vmatpush2.msra.mxu0 0.0
    %1626 = vmatprep.subr.mxu0 0.0
    %1627 = vmatpush2.msra.mxu0 0.0
    %1628 = vmatprep.subr.mxu0 0.0
    %1629 = vmatpush2.msra.mxu0 0.0
    %1630 = vmatprep.subr.mxu0 0.0
    %1631 = vmatpush2.msra.mxu0 0.0
    %1632 = vmatprep.subr.mxu0 0.0
    %1633 = vmatpush2.msra.mxu0 0.0
    %1634 = vmatprep.subr.mxu0 0.0
    %1635 = vmatpush2.msra.mxu0 0.0
    %1636 = vmatprep.subr.mxu0 0.0
    %1637 = vmatpush2.msra.mxu0 0.0
    %1638 = vmatprep.subr.mxu0 0.0
    %1639 = vmatpush2.msra.mxu0 0.0
    %1640 = vmatprep.subr.mxu0 0.0
    %1641 = vmatpush2.msra.mxu0 0.0
    %1642 = vmatprep.subr.mxu0 0.0
    %1643 = vmatpush2.msra.mxu0 0.0
    %1644 = vmatprep.subr.mxu0 0.0
    %1645 = vmatpush2.msra.mxu0 0.0
    %1646 = vmatprep.subr.mxu0 0.0
    %1647 = vmatpush2.msra.mxu0 0.0
    %1648 = vmatprep.subr.mxu0 0.0
    %1649 = vmatpush2.msra.mxu0 0.0
    %1650 = vmatprep.subr.mxu0 0.0
    %1651 = vmatpush2.msra.mxu0 0.0
    %1652 = vmatprep.subr.mxu0 0.0
    %1653 = vmatpush2.msra.mxu0 0.0
    %1654 = vmatprep.mubr.f32.mxu0 0.0
    %1655 = vmatmul.mubr.f32.gmra.mxu0 %v1567
    %v1656 = vpop.f32.mrf.mxu0
    %v1657 = vadd.f32 0.0, %v1656
    %v1658 = vpop.f32.mrf.mxu0
    %1659 = vmatprep.mubr.f32.mxu0 0.0
    %1660 = vmatmul.mubr.f32.gmra.mxu0 %v1570
    %v1661 = vpop.f32.mrf.mxu0
    %v1662 = vadd.f32 0.0, %v1661
    %v1663 = vpop.f32.mrf.mxu0
    %1664 = vmatprep.mubr.f32.mxu0 0.0
    %1665 = vmatmul.mubr.f32.gmra.mxu0 %v1573
    %v1666 = vpop.f32.mrf.mxu0
    %v1667 = vadd.f32 0.0, %v1666
    %v1668 = vpop.f32.mrf.mxu0
    %1669 = vmatprep.mubr.f32.mxu0 0.0
    %1670 = vmatmul.mubr.f32.gmra.mxu0 %v1576
    %v1671 = vpop.f32.mrf.mxu0
    %v1672 = vadd.f32 0.0, %v1671
    %v1673 = vpop.f32.mrf.mxu0
    %1674 = vmatprep.mubr.f32.mxu0 0.0
    %1675 = vmatmul.mubr.f32.gmra.mxu0 %v1579
    %v1676 = vpop.f32.mrf.mxu0
    %v1677 = vadd.f32 0.0, %v1676
    %v1678 = vpop.f32.mrf.mxu0
    %1679 = vmatprep.mubr.f32.mxu0 0.0
    %1680 = vmatmul.mubr.f32.gmra.mxu0 %v1582
    %v1681 = vpop.f32.mrf.mxu0
    %v1682 = vadd.f32 0.0, %v1681
    %v1683 = vpop.f32.mrf.mxu0
    %1684 = vmatprep.mubr.f32.mxu0 0.0
    %1685 = vmatmul.mubr.f32.gmra.mxu0 %v1585
    %v1686 = vpop.f32.mrf.mxu0
    %v1687 = vadd.f32 0.0, %v1686
    %v1688 = vpop.f32.mrf.mxu0
    %1689 = vmatprep.mubr.f32.mxu0 0.0
    %1690 = vmatmul.mubr.f32.gmra.mxu0 %v1588
    %v1691 = vpop.f32.mrf.mxu0
    %v1692 = vadd.f32 0.0, %v1691
    %v1693 = vpop.f32.mrf.mxu0
    %1694 = vdwg.mxu0
    %1703 = vrot.lane.b32.xlu0 %v1657, 1
    %v1704 = vpop.permute.xlu0 %1703
    %1705 = vrot.lane.b32.xlu0 %v1662, 1
    %v1706 = vpop.permute.xlu0 %1705
    %1707 = vrot.lane.b32.xlu0 %v1667, 1
    %v1708 = vpop.permute.xlu0 %1707
    %1709 = vrot.lane.b32.xlu0 %v1672, 1
    %v1710 = vpop.permute.xlu0 %1709
    %1711 = vrot.lane.b32.xlu0 %v1677, 1
    %v1712 = vpop.permute.xlu0 %1711
    %1713 = vrot.lane.b32.xlu0 %v1682, 1
    %v1714 = vpop.permute.xlu0 %1713
    %1715 = vrot.lane.b32.xlu0 %v1687, 1
    %v1716 = vpop.permute.xlu0 %1715
    %1717 = vrot.lane.b32.xlu0 %v1692, 1
    %v1718 = vpop.permute.xlu0 %1717
    %v1727 = vsel %vm78, 0.0, %v1704
    %v1728 = vsel %vm78, 0.0, %v1706
    %v1729 = vsel %vm78, 0.0, %v1708
    %v1730 = vsel %vm78, 0.0, %v1710
    %v1731 = vsel %vm78, 0.0, %v1712
    %v1732 = vsel %vm78, 0.0, %v1714
    %v1733 = vsel %vm78, 0.0, %v1716
    %v1734 = vsel %vm78, 0.0, %v1718
    %1735 = vrot.lane.b32.xlu0 %v1657, 127
    %v1736 = vpop.permute.xlu0 %1735
    %1737 = vrot.lane.b32.xlu0 %v1662, 127
    %v1738 = vpop.permute.xlu0 %1737
    %1739 = vrot.lane.b32.xlu0 %v1667, 127
    %v1740 = vpop.permute.xlu0 %1739
    %1741 = vrot.lane.b32.xlu0 %v1672, 127
    %v1742 = vpop.permute.xlu0 %1741
    %1743 = vrot.lane.b32.xlu0 %v1677, 127
    %v1744 = vpop.permute.xlu0 %1743
    %1745 = vrot.lane.b32.xlu0 %v1682, 127
    %v1746 = vpop.permute.xlu0 %1745
    %1747 = vrot.lane.b32.xlu0 %v1687, 127
    %v1748 = vpop.permute.xlu0 %1747
    %1749 = vrot.lane.b32.xlu0 %v1692, 127
    %v1750 = vpop.permute.xlu0 %1749
    %v1759 = vsel %vm87, %v1736, 0.0
    %v1760 = vsel %vm87, %v1738, 0.0
    %v1761 = vsel %vm87, %v1740, 0.0
    %v1762 = vsel %vm87, %v1742, 0.0
    %v1763 = vsel %vm87, %v1744, 0.0
    %v1764 = vsel %vm87, %v1746, 0.0
    %v1765 = vsel %vm87, %v1748, 0.0
    %v1766 = vsel %vm87, %v1750, 0.0
    %v1767 = vld [vmem:[%s9] sm:$0xf]
    %v1768 = vld [vmem:[%s9 + $0x4] sm:$0xf]
    %v1769 = vpack.c.bf16 %v1728, %v1727
    %v1770 = vpack.c.bf16 %v1730, %v1729
    %v1771 = vpack.c.bf16 %v1662, %v1657
    %v1772 = vpack.c.bf16 %v1672, %v1667
    %v1773 = vpack.c.bf16 %v1760, %v1759
    %v1774 = vpack.c.bf16 %v1762, %v1761
    %v1775 = vpack.c.bf16 %v1732, %v1731
    %v1776 = vpack.c.bf16 %v1734, %v1733
    %v1777 = vpack.c.bf16 %v1682, %v1677
    %v1778 = vpack.c.bf16 %v1692, %v1687
    %v1779 = vpack.c.bf16 %v1764, %v1763
    %v1780 = vpack.c.bf16 %v1766, %v1765
    %v1781 = vld [vmem:[%s10] sm:$0xff]
    %v1782 = vld [vmem:[%s10 + $0x8] sm:$0xff]
    %1784 = vset.pattern.permute.xlu0 0
    %1785 = vperm.xlu0 %1784, %v1781
    %v1786 = vpop.permute.xlu0 %1785
    %1789 = vset.pattern.permute.xlu0 0
    %1790 = vperm.xlu0 %1789, %v1782
    %v1791 = vpop.permute.xlu0 %1790
    %v1795 = vunpack.c.l.b16 %v1767
    %v1796 = vunpack.c.l.b16 %v1768
    %v1797 = vpack.c.b16 %v1796, %v1795
    %v1799 = vsel %vm880, %v1797, 0
    %1801 = vmatprep.subr.bf16.mxu0 0
    %1802 = vmatpush1.bf16.msra.mxu0 0
    %1803 = vmatprep.subr.bf16.mxu0 0
    %1804 = vmatpush1.bf16.msra.mxu0 0
    %1805 = vmatprep.subr.bf16.mxu0 0
    %1806 = vmatpush1.bf16.msra.mxu0 %v1774
    %1807 = vmatprep.subr.bf16.mxu0 0
    %1808 = vmatpush1.bf16.msra.mxu0 %v1773
    %1809 = vmatprep.subr.bf16.mxu0 0
    %1810 = vmatpush1.bf16.msra.mxu0 %v1772
    %1811 = vmatprep.subr.bf16.mxu0 0
    %1812 = vmatpush1.bf16.msra.mxu0 %v1771
    %1813 = vmatprep.subr.bf16.mxu0 0
    %1814 = vmatpush1.bf16.msra.mxu0 %v1770
    %1815 = vmatprep.subr.bf16.mxu0 0
    %1816 = vmatpush1.bf16.msra.mxu0 %v1769
    %1817 = vmatprep.subr.bf16.mxu0 0
    %1818 = vmatpush2.bf16.msra.mxu0 0
    %1819 = vmatprep.subr.bf16.mxu0 0
    %1820 = vmatpush2.bf16.msra.mxu0 0
    %1821 = vmatprep.subr.bf16.mxu0 0
    %1822 = vmatpush2.bf16.msra.mxu0 0
    %1823 = vmatprep.subr.bf16.mxu0 0
    %1824 = vmatpush2.bf16.msra.mxu0 0
    %1825 = vmatprep.subr.bf16.mxu0 0
    %1826 = vmatpush2.bf16.msra.mxu0 0
    %1827 = vmatprep.subr.bf16.mxu0 0
    %1828 = vmatpush2.bf16.msra.mxu0 0
    %1829 = vmatprep.subr.bf16.mxu0 0
    %1830 = vmatpush2.bf16.msra.mxu0 0
    %1831 = vmatprep.subr.bf16.mxu0 0
    %1832 = vmatpush2.bf16.msra.mxu0 0
    %1833 = vmatprep.mubr.bf16.mxu0 0
    %1834 = vmatmul.mubr.bf16.gmra.mxu0 %v1799
    %v1835 = vpop.f32.mrf.mxu0
    %v1836 = vadd.f32 %v1786, %v1835
    %v1837 = vpop.f32.mrf.mxu0
    %v1838 = vpop.f32.mrf.mxu0
    %v1839 = vadd.f32 %v1791, %v1838
    %v1840 = vpop.f32.mrf.mxu0
    %1841 = vdwg.mxu0
    %1842 = vmatprep.subr.bf16.mxu0 0
    %1843 = vmatpush1.bf16.msra.mxu0 0
    %1844 = vmatprep.subr.bf16.mxu0 0
    %1845 = vmatpush1.bf16.msra.mxu0 0
    %1846 = vmatprep.subr.bf16.mxu0 0
    %1847 = vmatpush1.bf16.msra.mxu0 %v1780
    %1848 = vmatprep.subr.bf16.mxu0 0
    %1849 = vmatpush1.bf16.msra.mxu0 %v1779
    %1850 = vmatprep.subr.bf16.mxu0 0
    %1851 = vmatpush1.bf16.msra.mxu0 %v1778
    %1852 = vmatprep.subr.bf16.mxu0 0
    %1853 = vmatpush1.bf16.msra.mxu0 %v1777
    %1854 = vmatprep.subr.bf16.mxu0 0
    %1855 = vmatpush1.bf16.msra.mxu0 %v1776
    %1856 = vmatprep.subr.bf16.mxu0 0
    %1857 = vmatpush1.bf16.msra.mxu0 %v1775
    %1858 = vmatprep.subr.bf16.mxu0 0
    %1859 = vmatpush2.bf16.msra.mxu0 0
    %1860 = vmatprep.subr.bf16.mxu0 0
    %1861 = vmatpush2.bf16.msra.mxu0 0
    %1862 = vmatprep.subr.bf16.mxu0 0
    %1863 = vmatpush2.bf16.msra.mxu0 0
    %1864 = vmatprep.subr.bf16.mxu0 0
    %1865 = vmatpush2.bf16.msra.mxu0 0
    %1866 = vmatprep.subr.bf16.mxu0 0
    %1867 = vmatpush2.bf16.msra.mxu0 0
    %1868 = vmatprep.subr.bf16.mxu0 0
    %1869 = vmatpush2.bf16.msra.mxu0 0
    %1870 = vmatprep.subr.bf16.mxu0 0
    %1871 = vmatpush2.bf16.msra.mxu0 0
    %1872 = vmatprep.subr.bf16.mxu0 0
    %1873 = vmatpush2.bf16.msra.mxu0 0
    %1874 = vmatprep.mubr.bf16.mxu0 0
    %1875 = vmatmul.mubr.bf16.gmra.mxu0 %v1799
    %v1876 = vpop.f32.mrf.mxu0
    %v1877 = vadd.f32 %v1786, %v1876
    %v1878 = vpop.f32.mrf.mxu0
    %v1879 = vpop.f32.mrf.mxu0
    %v1880 = vadd.f32 %v1791, %v1879
    %v1881 = vpop.f32.mrf.mxu0
    %1882 = vdwg.mxu0
    %v1883 = vmax.f32 %v1836, 0.0
    %v1884 = vmax.f32 %v1839, 0.0
    %v1885 = vmax.f32 %v1877, 0.0
    %v1886 = vmax.f32 %v1880, 0.0
    %1891 = vrot.lane.b32.xlu0 %v1883, 1
    %v1892 = vpop.permute.xlu0 %1891
    %1893 = vrot.lane.b32.xlu0 %v1884, 1
    %v1894 = vpop.permute.xlu0 %1893
    %1895 = vrot.lane.b32.xlu0 %v1885, 1
    %v1896 = vpop.permute.xlu0 %1895
    %1897 = vrot.lane.b32.xlu0 %v1886, 1
    %v1898 = vpop.permute.xlu0 %1897
    %v1903 = vsel %vm78, 0.0, %v1892
    %v1904 = vsel %vm78, 0.0, %v1894
    %v1905 = vsel %vm78, 0.0, %v1896
    %v1906 = vsel %vm78, 0.0, %v1898
    %1907 = vrot.lane.b32.xlu0 %v1883, 127
    %v1908 = vpop.permute.xlu0 %1907
    %1909 = vrot.lane.b32.xlu0 %v1884, 127
    %v1910 = vpop.permute.xlu0 %1909
    %1911 = vrot.lane.b32.xlu0 %v1885, 127
    %v1912 = vpop.permute.xlu0 %1911
    %1913 = vrot.lane.b32.xlu0 %v1886, 127
    %v1914 = vpop.permute.xlu0 %1913
    %v1919 = vsel %vm87, %v1908, 0.0
    %v1920 = vsel %vm87, %v1910, 0.0
    %v1921 = vsel %vm87, %v1912, 0.0
    %v1922 = vsel %vm87, %v1914, 0.0
    %v1923 = vld [vmem:[%s11] sm:$0x1]
    %v1924 = vpack.c.bf16 %v1904, %v1903
    %v1925 = vpack.c.bf16 %v1884, %v1883
    %v1926 = vpack.c.bf16 %v1920, %v1919
    %v1927 = vpack.c.bf16 %v1906, %v1905
    %v1928 = vpack.c.bf16 %v1886, %v1885
    %v1929 = vpack.c.bf16 %v1922, %v1921
    %v1930 = vld [vmem:[#allocation2] sm:$0x1]
    %1932 = vset.pattern.permute.xlu0 0
    %1933 = vperm.xlu0 %1932, %v1930
    %v1934 = vpop.permute.xlu0 %1933
    %v1936 = vlaneseq
    %v1937 = vshrl.u32 %v1936, 7
    %v1938 = vsub.s32 0, %v1937
    %v1939 = vrot.slane %v1934, %v1938
    %v1941 = vsel %vm428, %v1923, 0
    %1943 = vmatprep.subr.bf16.mxu0 0
    %1944 = vmatpush1.bf16.msra.mxu0 0
    %1945 = vmatprep.subr.bf16.mxu0 0
    %1946 = vmatpush1.bf16.msra.mxu0 0
    %1947 = vmatprep.subr.bf16.mxu0 0
    %1948 = vmatpush1.bf16.msra.mxu0 0
    %1949 = vmatprep.subr.bf16.mxu0 0
    %1950 = vmatpush1.bf16.msra.mxu0 0
    %1951 = vmatprep.subr.bf16.mxu0 0
    %1952 = vmatpush1.bf16.msra.mxu0 0
    %1953 = vmatprep.subr.bf16.mxu0 0
    %1954 = vmatpush1.bf16.msra.mxu0 %v1926
    %1955 = vmatprep.subr.bf16.mxu0 0
    %1956 = vmatpush1.bf16.msra.mxu0 %v1925
    %1957 = vmatprep.subr.bf16.mxu0 0
    %1958 = vmatpush1.bf16.msra.mxu0 %v1924
    %1959 = vmatprep.subr.bf16.mxu0 0
    %1960 = vmatpush2.bf16.msra.mxu0 0
    %1961 = vmatprep.subr.bf16.mxu0 0
    %1962 = vmatpush2.bf16.msra.mxu0 0
    %1963 = vmatprep.subr.bf16.mxu0 0
    %1964 = vmatpush2.bf16.msra.mxu0 0
    %1965 = vmatprep.subr.bf16.mxu0 0
    %1966 = vmatpush2.bf16.msra.mxu0 0
    %1967 = vmatprep.subr.bf16.mxu0 0
    %1968 = vmatpush2.bf16.msra.mxu0 0
    %1969 = vmatprep.subr.bf16.mxu0 0
    %1970 = vmatpush2.bf16.msra.mxu0 0
    %1971 = vmatprep.subr.bf16.mxu0 0
    %1972 = vmatpush2.bf16.msra.mxu0 0
    %1973 = vmatprep.subr.bf16.mxu0 0
    %1974 = vmatpush2.bf16.msra.mxu0 0
    %1975 = vmatprep.mubr.bf16.mxu0 0
    %1976 = vmatmul.mubr.bf16.gmra.mxu0 %v1941
    %v1977 = vpop.f32.mrf.mxu0
    %v1978 = vadd.f32 %v1939, %v1977
    %v1979 = vpop.f32.mrf.mxu0
    %v1980 = vpop.f32.mrf.mxu0
    %v1981 = vpop.f32.mrf.mxu0
    %1982 = vdwg.mxu0
    %1983 = vmatprep.subr.bf16.mxu0 0
    %1984 = vmatpush1.bf16.msra.mxu0 0
    %1985 = vmatprep.subr.bf16.mxu0 0
    %1986 = vmatpush1.bf16.msra.mxu0 0
    %1987 = vmatprep.subr.bf16.mxu0 0
    %1988 = vmatpush1.bf16.msra.mxu0 0
    %1989 = vmatprep.subr.bf16.mxu0 0
    %1990 = vmatpush1.bf16.msra.mxu0 0
    %1991 = vmatprep.subr.bf16.mxu0 0
    %1992 = vmatpush1.bf16.msra.mxu0 0
    %1993 = vmatprep.subr.bf16.mxu0 0
    %1994 = vmatpush1.bf16.msra.mxu0 %v1929
    %1995 = vmatprep.subr.bf16.mxu0 0
    %1996 = vmatpush1.bf16.msra.mxu0 %v1928
    %1997 = vmatprep.subr.bf16.mxu0 0
    %1998 = vmatpush1.bf16.msra.mxu0 %v1927
    %1999 = vmatprep.subr.bf16.mxu0 0
    %2000 = vmatpush2.bf16.msra.mxu0 0
    %2001 = vmatprep.subr.bf16.mxu0 0
    %2002 = vmatpush2.bf16.msra.mxu0 0
    %2003 = vmatprep.subr.bf16.mxu0 0
    %2004 = vmatpush2.bf16.msra.mxu0 0
    %2005 = vmatprep.subr.bf16.mxu0 0
    %2006 = vmatpush2.bf16.msra.mxu0 0
    %2007 = vmatprep.subr.bf16.mxu0 0
    %2008 = vmatpush2.bf16.msra.mxu0 0
    %2009 = vmatprep.subr.bf16.mxu0 0
    %2010 = vmatpush2.bf16.msra.mxu0 0
    %2011 = vmatprep.subr.bf16.mxu0 0
    %2012 = vmatpush2.bf16.msra.mxu0 0
    %2013 = vmatprep.subr.bf16.mxu0 0
    %2014 = vmatpush2.bf16.msra.mxu0 0
    %2015 = vmatprep.mubr.bf16.mxu0 0
    %2016 = vmatmul.mubr.bf16.gmra.mxu0 %v1941
    %v2017 = vpop.f32.mrf.mxu0
    %v2018 = vadd.f32 %v1939, %v2017
    %v2019 = vpop.f32.mrf.mxu0
    %v2020 = vpop.f32.mrf.mxu0
    %v2021 = vpop.f32.mrf.mxu0
    %2022 = vdwg.mxu0
    %v2023 = vsub.f32 0.0, %v1978
    %v2024 = vsub.f32 0.0, %v2018
    %v2025 = vmul.f32 %v2023, 1.442695
    %v2026 = vpow.pop %v2025
    %v2027 = vmul.f32 %v2024, 1.442695
    %v2028 = vpow.pop %v2027
    %v2029 = vadd.f32 %v2026, 1.0
    %v2030 = vadd.f32 %v2028, 1.0
    %v2031 = vrcp.pop %v2029
    %v2032 = vmul.f32 1.0, %v2031
    %v2033 = vrcp.pop %v2030
    %v2034 = vmul.f32 1.0, %v2033
    %vm2035 = vcmask 122880
    %2036 = vst.msk [vmem:[#allocation3] sm:$0x1] %vm2035, %v2032
    %2037 = vst.msk [vmem:[#allocation3 + $0x1] sm:$0x1] %vm2035, %v2034
    // Predicated region
    $region70: #{cnn_autoencoder_forward.1} parent=1 // pred_check
      _
    $region71: #{cnn_autoencoder_forward.1} parent=1 // pred_check_branch
      %2039 = sbr.rel (0) target = $region73
    $region72: #{cnn_autoencoder_forward.1} parent=1 // pred_region
      %s2041 = ssub.s32 32, 32
      %2042 = vsyncadd [#allocation4], %s2041
      %s2043 = sshll.u32 [#allocation3], 4
      %s2044 = int_to_ptr.vmem [resolvable:$true] %s2043
      %2049 = dma.vmem_to_hbm [thread:$0]  %s2044, 32, %s17, [#allocation4], 16, 16, 1
    $region73: #{cnn_autoencoder_forward.1} parent=1 // pred_fallthru
      _
    // Predicated region
    $region74: #{cnn_autoencoder_forward.1} parent=1 // pred_check
      _
    $region75: #{cnn_autoencoder_forward.1} parent=1 // pred_check_branch
      %2051 = sbr.rel (0) target = $region77
    $region76: #{cnn_autoencoder_forward.1} parent=1 // pred_region
      %2052 = dma.done [#allocation4], 32
    $region77: #{cnn_autoencoder_forward.1} parent=1 // pred_fallthru
      _
    %2053 = vsyncpa [#allocation4], 1

</llo_original>
